<compile_context>
chip_gen: v7x
topology: tpu7x:2x2x1
jax: 0.10.0
libtpu: 0.0.40
codegen_flags: <defaults>
</compile_context>

<pallas_src>
import math

import jax
import jax.numpy as jnp
from jax.experimental import pallas as pl
from jax.experimental.pallas import tpu as pltpu

# ---- model config (small, consistent with the module) ----
BATCH = 2
SEQ_Q = 8          # length of `input_tensor` (language stream)
SEQ_C = 16         # length of `ctx_tensor`  (vision stream)
HIDDEN = 32
NUM_HEADS = 4
HEAD_DIM = HIDDEN // NUM_HEADS
LN_EPS = 1e-12


def _cross_attn_kernel(x_ref, ctx_ref, mask_ref,
                       wqkv_ref, bq_ref, wo_ref, vecs_ref,
                       out_ref):
    # x_ref:    (bb*SEQ_Q, HIDDEN)       batch rows stacked along sublanes
    # ctx_ref:  (bb*SEQ_C, HIDDEN)
    # mask_ref: (bb*SEQ_Q, bb*SEQ_C)     combined block-diagonal additive mask
    # wqkv_ref: (3, NH, HIDDEN, HEAD_DIM)  [q has 1/sqrt(HD) folded in]
    # bq_ref:   (NH, 1, HEAD_DIM)          [scaled]
    # wo_ref:   (NH, HEAD_DIM, HIDDEN)
    # vecs_ref: (3, HIDDEN)                rows: bo' (= bo + bv@wo), gamma, beta
    xs = x_ref[...]                 # (bb*SQ, H)
    cs = ctx_ref[...]               # (bb*SC, H)
    mask = mask_ref[...]            # (bb*SQ, bb*SC), loaded once (no per-head bcast)

    hs = None
    # Static head loop; per-head weights indexed on leading (free) axes, so no
    # lane slicing of activations and no lane-wise concat of head outputs.
    for h in range(NUM_HEADS):
        q = jnp.dot(xs, wqkv_ref[0, h], preferred_element_type=jnp.float32) + bq_ref[h]
        k = jnp.dot(cs, wqkv_ref[1, h], preferred_element_type=jnp.float32)  # bk dropped
        v = jnp.dot(cs, wqkv_ref[2, h], preferred_element_type=jnp.float32)  # bv folded into bo'

        # scores: contract the HEAD_DIM axes directly (no k transpose).
        s = jax.lax.dot_general(q, k, (((1,), (1,)), ((), ())),
                                preferred_element_type=jnp.float32)          # (bb*SQ, bb*SC)
        s = s + mask
        s = s - jnp.max(s, axis=-1, keepdims=True)
        p = jnp.exp(s)
        inv = pl.reciprocal(jnp.sum(p, axis=-1, keepdims=True), approx=True)  # EUP

        ctx_h = jnp.dot(p, v, preferred_element_type=jnp.float32) * inv       # (bb*SQ, HD)
        part = jnp.dot(ctx_h, wo_ref[h], preferred_element_type=jnp.float32)  # (bb*SQ, H)
        hs = part if hs is None else hs + part

    bo = vecs_ref[0:1, :]
    gamma = vecs_ref[1:2, :]
    beta = vecs_ref[2:3, :]

    # LxmertAttentionOutput epilogue, fused over the whole block:
    # +bias, (dropout = identity in eval), residual, LayerNorm, single store.
    resid = hs + bo + xs
    mean = jnp.mean(resid, axis=-1, keepdims=True)
    var = jnp.mean((resid - mean) ** 2, axis=-1, keepdims=True)
    out_ref[...] = (resid - mean) * jax.lax.rsqrt(var + LN_EPS) * gamma + beta


def _num_tensorcores_per_chip():
    """v7x exposes 2 TensorCores per chip; v5e/v6e expose 1."""
    try:
        kind = jax.devices()[0].device_kind.lower()
    except Exception:
        return 1
    return 2 if "v7" in kind else 1


def _cost_estimate(batch):
    proj_flops = 2 * batch * HIDDEN * HIDDEN * (SEQ_Q + 2 * SEQ_C)   # q/k/v projections
    out_flops = 2 * batch * SEQ_Q * HIDDEN * HIDDEN                  # wo projection
    attn_flops = 2 * batch * NUM_HEADS * SEQ_Q * SEQ_C * HEAD_DIM * 2
    ln_flops = 10 * batch * SEQ_Q * HIDDEN
    transcend = batch * NUM_HEADS * SEQ_Q * SEQ_C                    # exp
    bytes_accessed = 4 * (
        batch * SEQ_Q * HIDDEN * 2          # x in + out
        + batch * SEQ_C * HIDDEN            # ctx
        + batch * SEQ_Q * batch * SEQ_C     # combined mask
        + 4 * HIDDEN * HIDDEN               # wq/wk/wv/wo
        + 4 * HIDDEN                        # bq, bo', gamma, beta
    )
    return pl.CostEstimate(flops=int(proj_flops + out_flops + attn_flops + ln_flops),
                           transcendentals=int(transcend),
                           bytes_accessed=int(bytes_accessed))


def prepare_params(raw):
    """One-time host-side prep: per-head split, fold 1/sqrt(HD) into Wq/bq,
    drop bk (softmax-invariant), fold bv through wo into bo, pack arrays."""
    scale = 1.0 / math.sqrt(HEAD_DIM)

    def split_out(w):            # (H_in, H_out) -> (NH, H_in, HD)
        return jnp.transpose(w.reshape(HIDDEN, NUM_HEADS, HEAD_DIM), (1, 0, 2))

    wqkv = jnp.stack([split_out(raw["wq"] * scale),
                      split_out(raw["wk"]),
                      split_out(raw["wv"])], axis=0)               # (3, NH, H, HD)
    bq = jnp.transpose((raw["bq"] * scale).reshape(1, NUM_HEADS, HEAD_DIM),
                       (1, 0, 2))                                  # (NH, 1, HD)
    wo = raw["wo"].reshape(NUM_HEADS, HEAD_DIM, HIDDEN)            # (NH, HD, H)

    # bv contributes exactly bv @ wo to the head-summed output (softmax rows sum to 1).
    bo_folded = raw["bo"] + raw["bv"] @ raw["wo"]                  # (1, H)
    vecs = jnp.concatenate([bo_folded, raw["ln_gamma"], raw["ln_beta"]], axis=0)  # (3, H)

    return {"wqkv": wqkv, "bq": bq, "wo": wo, "vecs": vecs}


def _build_combined_mask(ctx_att_mask, steps, bb):
    """(steps, bb*SEQ_Q, bb*SEQ_C) additive mask: per-batch attention mask on the
    block-diagonal, -1e9 on cross-batch blocks (so one fat softmax per step)."""
    m = ctx_att_mask.astype(jnp.float32).reshape(steps, bb, SEQ_C)
    out = jnp.full((steps, bb * SEQ_Q, bb * SEQ_C), -1e9, jnp.float32)
    for b in range(bb):
        block = jnp.broadcast_to(m[:, b, None, :], (steps, SEQ_Q, SEQ_C))
        out = out.at[:, b * SEQ_Q:(b + 1) * SEQ_Q,
                     b * SEQ_C:(b + 1) * SEQ_C].set(block)
    return out


def lxmert_cross_attention(x, ctx, ctx_att_mask, params):
    """x: (B, SEQ_Q, H), ctx: (B, SEQ_C, H), ctx_att_mask: (B, SEQ_C) additive.
    `params` must come from prepare_params()."""
    B = x.shape[0]

    cores = _num_tensorcores_per_chip()
    # Shard by core count only when there is enough batch to amortize the extra
    # per-step prologue/epilogue (v7x, B > cores); otherwise one fat step.
    steps = cores if (cores > 1 and B > cores and B % cores == 0) else 1
    bb = B // steps

    xs = x.reshape(B * SEQ_Q, HIDDEN)
    cs = ctx.reshape(B * SEQ_C, HIDDEN)
    mask = _build_combined_mask(ctx_att_mask, steps, bb)

    def full_spec(arr):
        nd = arr.ndim
        return pl.BlockSpec(arr.shape, lambda i, _nd=nd: (0,) * _nd)

    in_specs = [
        pl.BlockSpec((bb * SEQ_Q, HIDDEN), lambda i: (i, 0)),           # x rows
        pl.BlockSpec((bb * SEQ_C, HIDDEN), lambda i: (i, 0)),           # ctx rows
        pl.BlockSpec((None, bb * SEQ_Q, bb * SEQ_C), lambda i: (i, 0, 0)),  # mask (per step)
        full_spec(params["wqkv"]),
        full_spec(params["bq"]),
        full_spec(params["wo"]),
        full_spec(params["vecs"]),
    ]

    out = pl.pallas_call(
        _cross_attn_kernel,
        out_shape=jax.ShapeDtypeStruct((B * SEQ_Q, HIDDEN), jnp.float32),
        grid=(steps,),
        in_specs=in_specs,
        out_specs=pl.BlockSpec((bb * SEQ_Q, HIDDEN), lambda i: (i, 0)),
        compiler_params=pltpu.CompilerParams(
            dimension_semantics=("parallel",)),
        cost_estimate=_cost_estimate(B),
    )(xs, cs, mask,
      params["wqkv"], params["bq"], params["wo"], params["vecs"])

    return out.reshape(B, SEQ_Q, HIDDEN)


def _reference(x, ctx, mask, p):
    """Pure-JAX reference replicating the PyTorch module (eval mode), raw params."""
    def linear(a, w, b):
        return a @ w + b
    q = linear(x, p["wq"], p["bq"])
    k = linear(ctx, p["wk"], p["bk"])
    v = linear(ctx, p["wv"], p["bv"])

    def split(a, s):
        return a.reshape(a.shape[0], s, NUM_HEADS, HEAD_DIM).transpose(0, 2, 1, 3)

    qh, kh, vh = split(q, SEQ_Q), split(k, SEQ_C), split(v, SEQ_C)
    scores = jnp.einsum("bhqd,bhkd->bhqk", qh, kh) / math.sqrt(HEAD_DIM)
    scores = scores + mask[:, None, None, :]
    probs = jax.nn.softmax(scores, axis=-1)
    ctx_layer = jnp.einsum("bhqk,bhkd->bhqd", probs, vh)
    ctx_layer = ctx_layer.transpose(0, 2, 1, 3).reshape(x.shape[0], SEQ_Q, HIDDEN)
    # LxmertAttentionOutput: dense -> dropout (identity, eval) -> residual -> LN
    hs = linear(ctx_layer, p["wo"], p["bo"]) + x
    mean = jnp.mean(hs, axis=-1, keepdims=True)
    var = jnp.mean((hs - mean) ** 2, axis=-1, keepdims=True)
    return (hs - mean) * jax.lax.rsqrt(var + LN_EPS) * p["ln_gamma"] + p["ln_beta"]


def _init_raw_params(key):
    ks = jax.random.split(key, 8)
    std = 0.02

    def w(k):
        # nn.Linear stores weight as (out, in); pre-transpose to (in, out)
        return (jax.random.normal(k, (HIDDEN, HIDDEN), jnp.float32) * std).T

    def b(k):
        return jax.random.normal(k, (1, HIDDEN), jnp.float32) * std

    return {
        "wq": w(ks[0]), "bq": b(ks[1]),
        "wk": w(ks[2]), "bk": b(ks[3]),
        "wv": w(ks[4]), "bv": b(ks[5]),
        "wo": w(ks[6]), "bo": b(ks[7]),
        "ln_gamma": jnp.ones((1, HIDDEN), jnp.float32),
        "ln_beta": jnp.zeros((1, HIDDEN), jnp.float32),
    }


if __name__ == "__main__":
    key = jax.random.PRNGKey(0)
    k_x, k_c, k_m, k_p = jax.random.split(key, 4)

    x = jax.random.normal(k_x, (BATCH, SEQ_Q, HIDDEN), jnp.float32)
    ctx = jax.random.normal(k_c, (BATCH, SEQ_C, HIDDEN), jnp.float32)
    # additive mask: 0 for visible, -10000 for masked (HF convention)
    visible = jax.random.bernoulli(k_m, 0.8, (BATCH, SEQ_C))
    ctx_att_mask = jnp.where(visible, 0.0, -10000.0).astype(jnp.float32)

    raw_params = _init_raw_params(k_p)
    kernel_params = prepare_params(raw_params)      # one-time host-side prep

    out = lxmert_cross_attention(x, ctx, ctx_att_mask, kernel_params)
    out = jax.block_until_ready(out)

    ref = _reference(x, ctx, ctx_att_mask, raw_params)
    # tolerance slightly loosened vs pure-f32: approx EUP reciprocal in softmax
    assert jnp.allclose(out, ref, atol=1e-3, rtol=1e-3), "mismatch vs reference"

    print("KERNEL_OK")
</pallas_src>

<mosaic_0001>
module attributes {stable_mosaic.version = 11 : i64} {
  func.func @_cross_attn_kernel(%arg0: i32, %arg1: memref<16x32xf32, #tpu.memory_space<vmem>>, %arg2: memref<32x32xf32, #tpu.memory_space<vmem>>, %arg3: memref<1x16x32xf32, #tpu.memory_space<vmem>>, %arg4: memref<3x4x32x8xf32, #tpu.memory_space<vmem>>, %arg5: memref<4x1x8xf32, #tpu.memory_space<vmem>>, %arg6: memref<4x8x32xf32, #tpu.memory_space<vmem>>, %arg7: memref<3x32xf32, #tpu.memory_space<vmem>>, %arg8: memref<16x32xf32, #tpu.memory_space<vmem>>) attributes {dimension_semantics = [#tpu.dimension_semantics<parallel>], iteration_bounds = array<i64: 1>, scalar_prefetch = 0 : i64, scratch_operands = 0 : i64, tpu.core_type = #tpu.core_type<tc>, window_params = [{transform_indices = @transform_0, window_bounds = array<i64: 16, 32>}, {transform_indices = @transform_1, window_bounds = array<i64: 32, 32>}, {transform_indices = @transform_2, window_bounds = array<i64: 1, 16, 32>}, {pipeline_mode = #tpu.pipeline_mode<synchronous>, transform_indices = @transform_3, window_bounds = array<i64: 3, 4, 32, 8>}, {pipeline_mode = #tpu.pipeline_mode<synchronous>, transform_indices = @transform_4, window_bounds = array<i64: 4, 1, 8>}, {pipeline_mode = #tpu.pipeline_mode<synchronous>, transform_indices = @transform_5, window_bounds = array<i64: 4, 8, 32>}, {pipeline_mode = #tpu.pipeline_mode<synchronous>, transform_indices = @transform_6, window_bounds = array<i64: 3, 32>}, {transform_indices = @transform_7, window_bounds = array<i64: 16, 32>}]} {
    %c0 = arith.constant 0 : index
    %c0_0 = arith.constant 0 : index
    %0 = vector.load %arg1[%c0, %c0_0] : memref<16x32xf32, #tpu.memory_space<vmem>>, vector<16x32xf32>
    %c0_1 = arith.constant 0 : index
    %c0_2 = arith.constant 0 : index
    %1 = vector.load %arg2[%c0_1, %c0_2] : memref<32x32xf32, #tpu.memory_space<vmem>>, vector<32x32xf32>
    %c0_3 = arith.constant 0 : index
    %c0_4 = arith.constant 0 : index
    %c0_5 = arith.constant 0 : index
    %2 = vector.load %arg3[%c0_3, %c0_4, %c0_5] : memref<1x16x32xf32, #tpu.memory_space<vmem>>, vector<1x16x32xf32>
    %3 = vector.shape_cast %2 : vector<1x16x32xf32> to vector<16x32xf32>
    %c0_6 = arith.constant 0 : index
    %c0_7 = arith.constant 0 : index
    %c0_8 = arith.constant 0 : index
    %c0_9 = arith.constant 0 : index
    %4 = vector.load %arg4[%c0_6, %c0_7, %c0_8, %c0_9] : memref<3x4x32x8xf32, #tpu.memory_space<vmem>>, vector<1x1x32x8xf32>
    %5 = vector.shape_cast %4 : vector<1x1x32x8xf32> to vector<32x8xf32>
    %cst = arith.constant dense<0.000000e+00> : vector<16x8xf32>
    %6 = tpu.matmul %0, %5, %cst {dimension_numbers = #tpu.dot_dimension_numbers<[1], [0], [0], [1], [0, 0, 1, 1], [], []>} : vector<16x32xf32>, vector<32x8xf32>, vector<16x8xf32> -> vector<16x8xf32>
    %c0_10 = arith.constant 0 : index
    %c0_11 = arith.constant 0 : index
    %c0_12 = arith.constant 0 : index
    %7 = vector.load %arg5[%c0_10, %c0_11, %c0_12] : memref<4x1x8xf32, #tpu.memory_space<vmem>>, vector<1x1x8xf32>
    %8 = vector.shape_cast %7 : vector<1x1x8xf32> to vector<1x8xf32>
    %9 = vector.broadcast %8 : vector<1x8xf32> to vector<16x8xf32>
    %10 = arith.addf %6, %9 : vector<16x8xf32>
    %c1 = arith.constant 1 : index
    %c0_13 = arith.constant 0 : index
    %c0_14 = arith.constant 0 : index
    %c0_15 = arith.constant 0 : index
    %11 = vector.load %arg4[%c1, %c0_13, %c0_14, %c0_15] : memref<3x4x32x8xf32, #tpu.memory_space<vmem>>, vector<1x1x32x8xf32>
    %12 = vector.shape_cast %11 : vector<1x1x32x8xf32> to vector<32x8xf32>
    %cst_16 = arith.constant dense<0.000000e+00> : vector<32x8xf32>
    %13 = tpu.matmul %1, %12, %cst_16 {dimension_numbers = #tpu.dot_dimension_numbers<[1], [0], [0], [1], [0, 0, 1, 1], [], []>} : vector<32x32xf32>, vector<32x8xf32>, vector<32x8xf32> -> vector<32x8xf32>
    %c2 = arith.constant 2 : index
    %c0_17 = arith.constant 0 : index
    %c0_18 = arith.constant 0 : index
    %c0_19 = arith.constant 0 : index
    %14 = vector.load %arg4[%c2, %c0_17, %c0_18, %c0_19] : memref<3x4x32x8xf32, #tpu.memory_space<vmem>>, vector<1x1x32x8xf32>
    %15 = vector.shape_cast %14 : vector<1x1x32x8xf32> to vector<32x8xf32>
    %cst_20 = arith.constant dense<0.000000e+00> : vector<32x8xf32>
    %16 = tpu.matmul %1, %15, %cst_20 {dimension_numbers = #tpu.dot_dimension_numbers<[1], [0], [0], [1], [0, 0, 1, 1], [], []>} : vector<32x32xf32>, vector<32x8xf32>, vector<32x8xf32> -> vector<32x8xf32>
    %cst_21 = arith.constant dense<0.000000e+00> : vector<16x32xf32>
    %17 = tpu.matmul %10, %13, %cst_21 {dimension_numbers = #tpu.dot_dimension_numbers<[1], [1], [0], [0], [0, 0, 1, 0], [], []>} : vector<16x8xf32>, vector<32x8xf32>, vector<16x32xf32> -> vector<16x32xf32>
    %18 = arith.addf %17, %3 : vector<16x32xf32>
    %cst_22 = arith.constant dense<0xFF800000> : vector<16xf32>
    %19 = vector.multi_reduction <maximumf>, %18, %cst_22 [1] : vector<16x32xf32> to vector<16xf32>
    %20 = vector.shape_cast %19 : vector<16xf32> to vector<16x1xf32>
    %21 = vector.broadcast %20 : vector<16x1xf32> to vector<16x32xf32>
    %22 = arith.subf %18, %21 : vector<16x32xf32>
    %23 = math.exp %22 : vector<16x32xf32>
    %cst_23 = arith.constant dense<0.000000e+00> : vector<16xf32>
    %24 = vector.multi_reduction <add>, %23, %cst_23 [1] : vector<16x32xf32> to vector<16xf32>
    %25 = vector.shape_cast %24 : vector<16xf32> to vector<16x1xf32>
    %26 = tpu.reciprocal %25 {approx = true} : vector<16x1xf32> -> vector<16x1xf32>
    %cst_24 = arith.constant dense<0.000000e+00> : vector<16x8xf32>
    %27 = tpu.matmul %23, %16, %cst_24 {dimension_numbers = #tpu.dot_dimension_numbers<[1], [0], [0], [1], [0, 0, 1, 1], [], []>} : vector<16x32xf32>, vector<32x8xf32>, vector<16x8xf32> -> vector<16x8xf32>
    %28 = vector.broadcast %26 : vector<16x1xf32> to vector<16x8xf32>
    %29 = arith.mulf %27, %28 : vector<16x8xf32>
    %c0_25 = arith.constant 0 : index
    %c0_26 = arith.constant 0 : index
    %c0_27 = arith.constant 0 : index
    %30 = vector.load %arg6[%c0_25, %c0_26, %c0_27] : memref<4x8x32xf32, #tpu.memory_space<vmem>>, vector<1x8x32xf32>
    %31 = vector.shape_cast %30 : vector<1x8x32xf32> to vector<8x32xf32>
    %cst_28 = arith.constant dense<0.000000e+00> : vector<16x32xf32>
    %32 = tpu.matmul %29, %31, %cst_28 {dimension_numbers = #tpu.dot_dimension_numbers<[1], [0], [0], [1], [0, 0, 1, 1], [], []>} : vector<16x8xf32>, vector<8x32xf32>, vector<16x32xf32> -> vector<16x32xf32>
    %c0_29 = arith.constant 0 : index
    %c1_30 = arith.constant 1 : index
    %c0_31 = arith.constant 0 : index
    %c0_32 = arith.constant 0 : index
    %33 = vector.load %arg4[%c0_29, %c1_30, %c0_31, %c0_32] : memref<3x4x32x8xf32, #tpu.memory_space<vmem>>, vector<1x1x32x8xf32>
    %34 = vector.shape_cast %33 : vector<1x1x32x8xf32> to vector<32x8xf32>
    %cst_33 = arith.constant dense<0.000000e+00> : vector<16x8xf32>
    %35 = tpu.matmul %0, %34, %cst_33 {dimension_numbers = #tpu.dot_dimension_numbers<[1], [0], [0], [1], [0, 0, 1, 1], [], []>} : vector<16x32xf32>, vector<32x8xf32>, vector<16x8xf32> -> vector<16x8xf32>
    %c1_34 = arith.constant 1 : index
    %c0_35 = arith.constant 0 : index
    %c0_36 = arith.constant 0 : index
    %36 = vector.load %arg5[%c1_34, %c0_35, %c0_36] : memref<4x1x8xf32, #tpu.memory_space<vmem>>, vector<1x1x8xf32>
    %37 = vector.shape_cast %36 : vector<1x1x8xf32> to vector<1x8xf32>
    %38 = vector.broadcast %37 : vector<1x8xf32> to vector<16x8xf32>
    %39 = arith.addf %35, %38 : vector<16x8xf32>
    %c1_37 = arith.constant 1 : index
    %c1_38 = arith.constant 1 : index
    %c0_39 = arith.constant 0 : index
    %c0_40 = arith.constant 0 : index
    %40 = vector.load %arg4[%c1_37, %c1_38, %c0_39, %c0_40] : memref<3x4x32x8xf32, #tpu.memory_space<vmem>>, vector<1x1x32x8xf32>
    %41 = vector.shape_cast %40 : vector<1x1x32x8xf32> to vector<32x8xf32>
    %cst_41 = arith.constant dense<0.000000e+00> : vector<32x8xf32>
    %42 = tpu.matmul %1, %41, %cst_41 {dimension_numbers = #tpu.dot_dimension_numbers<[1], [0], [0], [1], [0, 0, 1, 1], [], []>} : vector<32x32xf32>, vector<32x8xf32>, vector<32x8xf32> -> vector<32x8xf32>
    %c2_42 = arith.constant 2 : index
    %c1_43 = arith.constant 1 : index
    %c0_44 = arith.constant 0 : index
    %c0_45 = arith.constant 0 : index
    %43 = vector.load %arg4[%c2_42, %c1_43, %c0_44, %c0_45] : memref<3x4x32x8xf32, #tpu.memory_space<vmem>>, vector<1x1x32x8xf32>
    %44 = vector.shape_cast %43 : vector<1x1x32x8xf32> to vector<32x8xf32>
    %cst_46 = arith.constant dense<0.000000e+00> : vector<32x8xf32>
    %45 = tpu.matmul %1, %44, %cst_46 {dimension_numbers = #tpu.dot_dimension_numbers<[1], [0], [0], [1], [0, 0, 1, 1], [], []>} : vector<32x32xf32>, vector<32x8xf32>, vector<32x8xf32> -> vector<32x8xf32>
    %cst_47 = arith.constant dense<0.000000e+00> : vector<16x32xf32>
    %46 = tpu.matmul %39, %42, %cst_47 {dimension_numbers = #tpu.dot_dimension_numbers<[1], [1], [0], [0], [0, 0, 1, 0], [], []>} : vector<16x8xf32>, vector<32x8xf32>, vector<16x32xf32> -> vector<16x32xf32>
    %47 = arith.addf %46, %3 : vector<16x32xf32>
    %cst_48 = arith.constant dense<0xFF800000> : vector<16xf32>
    %48 = vector.multi_reduction <maximumf>, %47, %cst_48 [1] : vector<16x32xf32> to vector<16xf32>
    %49 = vector.shape_cast %48 : vector<16xf32> to vector<16x1xf32>
    %50 = vector.broadcast %49 : vector<16x1xf32> to vector<16x32xf32>
    %51 = arith.subf %47, %50 : vector<16x32xf32>
    %52 = math.exp %51 : vector<16x32xf32>
    %cst_49 = arith.constant dense<0.000000e+00> : vector<16xf32>
    %53 = vector.multi_reduction <add>, %52, %cst_49 [1] : vector<16x32xf32> to vector<16xf32>
    %54 = vector.shape_cast %53 : vector<16xf32> to vector<16x1xf32>
    %55 = tpu.reciprocal %54 {approx = true} : vector<16x1xf32> -> vector<16x1xf32>
    %cst_50 = arith.constant dense<0.000000e+00> : vector<16x8xf32>
    %56 = tpu.matmul %52, %45, %cst_50 {dimension_numbers = #tpu.dot_dimension_numbers<[1], [0], [0], [1], [0, 0, 1, 1], [], []>} : vector<16x32xf32>, vector<32x8xf32>, vector<16x8xf32> -> vector<16x8xf32>
    %57 = vector.broadcast %55 : vector<16x1xf32> to vector<16x8xf32>
    %58 = arith.mulf %56, %57 : vector<16x8xf32>
    %c1_51 = arith.constant 1 : index
    %c0_52 = arith.constant 0 : index
    %c0_53 = arith.constant 0 : index
    %59 = vector.load %arg6[%c1_51, %c0_52, %c0_53] : memref<4x8x32xf32, #tpu.memory_space<vmem>>, vector<1x8x32xf32>
    %60 = vector.shape_cast %59 : vector<1x8x32xf32> to vector<8x32xf32>
    %cst_54 = arith.constant dense<0.000000e+00> : vector<16x32xf32>
    %61 = tpu.matmul %58, %60, %cst_54 {dimension_numbers = #tpu.dot_dimension_numbers<[1], [0], [0], [1], [0, 0, 1, 1], [], []>} : vector<16x8xf32>, vector<8x32xf32>, vector<16x32xf32> -> vector<16x32xf32>
    %62 = arith.addf %32, %61 : vector<16x32xf32>
    %c0_55 = arith.constant 0 : index
    %c2_56 = arith.constant 2 : index
    %c0_57 = arith.constant 0 : index
    %c0_58 = arith.constant 0 : index
    %63 = vector.load %arg4[%c0_55, %c2_56, %c0_57, %c0_58] : memref<3x4x32x8xf32, #tpu.memory_space<vmem>>, vector<1x1x32x8xf32>
    %64 = vector.shape_cast %63 : vector<1x1x32x8xf32> to vector<32x8xf32>
    %cst_59 = arith.constant dense<0.000000e+00> : vector<16x8xf32>
    %65 = tpu.matmul %0, %64, %cst_59 {dimension_numbers = #tpu.dot_dimension_numbers<[1], [0], [0], [1], [0, 0, 1, 1], [], []>} : vector<16x32xf32>, vector<32x8xf32>, vector<16x8xf32> -> vector<16x8xf32>
    %c2_60 = arith.constant 2 : index
    %c0_61 = arith.constant 0 : index
    %c0_62 = arith.constant 0 : index
    %66 = vector.load %arg5[%c2_60, %c0_61, %c0_62] : memref<4x1x8xf32, #tpu.memory_space<vmem>>, vector<1x1x8xf32>
    %67 = vector.shape_cast %66 : vector<1x1x8xf32> to vector<1x8xf32>
    %68 = vector.broadcast %67 : vector<1x8xf32> to vector<16x8xf32>
    %69 = arith.addf %65, %68 : vector<16x8xf32>
    %c1_63 = arith.constant 1 : index
    %c2_64 = arith.constant 2 : index
    %c0_65 = arith.constant 0 : index
    %c0_66 = arith.constant 0 : index
    %70 = vector.load %arg4[%c1_63, %c2_64, %c0_65, %c0_66] : memref<3x4x32x8xf32, #tpu.memory_space<vmem>>, vector<1x1x32x8xf32>
    %71 = vector.shape_cast %70 : vector<1x1x32x8xf32> to vector<32x8xf32>
    %cst_67 = arith.constant dense<0.000000e+00> : vector<32x8xf32>
    %72 = tpu.matmul %1, %71, %cst_67 {dimension_numbers = #tpu.dot_dimension_numbers<[1], [0], [0], [1], [0, 0, 1, 1], [], []>} : vector<32x32xf32>, vector<32x8xf32>, vector<32x8xf32> -> vector<32x8xf32>
    %c2_68 = arith.constant 2 : index
    %c2_69 = arith.constant 2 : index
    %c0_70 = arith.constant 0 : index
    %c0_71 = arith.constant 0 : index
    %73 = vector.load %arg4[%c2_68, %c2_69, %c0_70, %c0_71] : memref<3x4x32x8xf32, #tpu.memory_space<vmem>>, vector<1x1x32x8xf32>
    %74 = vector.shape_cast %73 : vector<1x1x32x8xf32> to vector<32x8xf32>
    %cst_72 = arith.constant dense<0.000000e+00> : vector<32x8xf32>
    %75 = tpu.matmul %1, %74, %cst_72 {dimension_numbers = #tpu.dot_dimension_numbers<[1], [0], [0], [1], [0, 0, 1, 1], [], []>} : vector<32x32xf32>, vector<32x8xf32>, vector<32x8xf32> -> vector<32x8xf32>
    %cst_73 = arith.constant dense<0.000000e+00> : vector<16x32xf32>
    %76 = tpu.matmul %69, %72, %cst_73 {dimension_numbers = #tpu.dot_dimension_numbers<[1], [1], [0], [0], [0, 0, 1, 0], [], []>} : vector<16x8xf32>, vector<32x8xf32>, vector<16x32xf32> -> vector<16x32xf32>
    %77 = arith.addf %76, %3 : vector<16x32xf32>
    %cst_74 = arith.constant dense<0xFF800000> : vector<16xf32>
    %78 = vector.multi_reduction <maximumf>, %77, %cst_74 [1] : vector<16x32xf32> to vector<16xf32>
    %79 = vector.shape_cast %78 : vector<16xf32> to vector<16x1xf32>
    %80 = vector.broadcast %79 : vector<16x1xf32> to vector<16x32xf32>
    %81 = arith.subf %77, %80 : vector<16x32xf32>
    %82 = math.exp %81 : vector<16x32xf32>
    %cst_75 = arith.constant dense<0.000000e+00> : vector<16xf32>
    %83 = vector.multi_reduction <add>, %82, %cst_75 [1] : vector<16x32xf32> to vector<16xf32>
    %84 = vector.shape_cast %83 : vector<16xf32> to vector<16x1xf32>
    %85 = tpu.reciprocal %84 {approx = true} : vector<16x1xf32> -> vector<16x1xf32>
    %cst_76 = arith.constant dense<0.000000e+00> : vector<16x8xf32>
    %86 = tpu.matmul %82, %75, %cst_76 {dimension_numbers = #tpu.dot_dimension_numbers<[1], [0], [0], [1], [0, 0, 1, 1], [], []>} : vector<16x32xf32>, vector<32x8xf32>, vector<16x8xf32> -> vector<16x8xf32>
    %87 = vector.broadcast %85 : vector<16x1xf32> to vector<16x8xf32>
    %88 = arith.mulf %86, %87 : vector<16x8xf32>
    %c2_77 = arith.constant 2 : index
    %c0_78 = arith.constant 0 : index
    %c0_79 = arith.constant 0 : index
    %89 = vector.load %arg6[%c2_77, %c0_78, %c0_79] : memref<4x8x32xf32, #tpu.memory_space<vmem>>, vector<1x8x32xf32>
    %90 = vector.shape_cast %89 : vector<1x8x32xf32> to vector<8x32xf32>
    %cst_80 = arith.constant dense<0.000000e+00> : vector<16x32xf32>
    %91 = tpu.matmul %88, %90, %cst_80 {dimension_numbers = #tpu.dot_dimension_numbers<[1], [0], [0], [1], [0, 0, 1, 1], [], []>} : vector<16x8xf32>, vector<8x32xf32>, vector<16x32xf32> -> vector<16x32xf32>
    %92 = arith.addf %62, %91 : vector<16x32xf32>
    %c0_81 = arith.constant 0 : index
    %c3 = arith.constant 3 : index
    %c0_82 = arith.constant 0 : index
    %c0_83 = arith.constant 0 : index
    %93 = vector.load %arg4[%c0_81, %c3, %c0_82, %c0_83] : memref<3x4x32x8xf32, #tpu.memory_space<vmem>>, vector<1x1x32x8xf32>
    %94 = vector.shape_cast %93 : vector<1x1x32x8xf32> to vector<32x8xf32>
    %cst_84 = arith.constant dense<0.000000e+00> : vector<16x8xf32>
    %95 = tpu.matmul %0, %94, %cst_84 {dimension_numbers = #tpu.dot_dimension_numbers<[1], [0], [0], [1], [0, 0, 1, 1], [], []>} : vector<16x32xf32>, vector<32x8xf32>, vector<16x8xf32> -> vector<16x8xf32>
    %c3_85 = arith.constant 3 : index
    %c0_86 = arith.constant 0 : index
    %c0_87 = arith.constant 0 : index
    %96 = vector.load %arg5[%c3_85, %c0_86, %c0_87] : memref<4x1x8xf32, #tpu.memory_space<vmem>>, vector<1x1x8xf32>
    %97 = vector.shape_cast %96 : vector<1x1x8xf32> to vector<1x8xf32>
    %98 = vector.broadcast %97 : vector<1x8xf32> to vector<16x8xf32>
    %99 = arith.addf %95, %98 : vector<16x8xf32>
    %c1_88 = arith.constant 1 : index
    %c3_89 = arith.constant 3 : index
    %c0_90 = arith.constant 0 : index
    %c0_91 = arith.constant 0 : index
    %100 = vector.load %arg4[%c1_88, %c3_89, %c0_90, %c0_91] : memref<3x4x32x8xf32, #tpu.memory_space<vmem>>, vector<1x1x32x8xf32>
    %101 = vector.shape_cast %100 : vector<1x1x32x8xf32> to vector<32x8xf32>
    %cst_92 = arith.constant dense<0.000000e+00> : vector<32x8xf32>
    %102 = tpu.matmul %1, %101, %cst_92 {dimension_numbers = #tpu.dot_dimension_numbers<[1], [0], [0], [1], [0, 0, 1, 1], [], []>} : vector<32x32xf32>, vector<32x8xf32>, vector<32x8xf32> -> vector<32x8xf32>
    %c2_93 = arith.constant 2 : index
    %c3_94 = arith.constant 3 : index
    %c0_95 = arith.constant 0 : index
    %c0_96 = arith.constant 0 : index
    %103 = vector.load %arg4[%c2_93, %c3_94, %c0_95, %c0_96] : memref<3x4x32x8xf32, #tpu.memory_space<vmem>>, vector<1x1x32x8xf32>
    %104 = vector.shape_cast %103 : vector<1x1x32x8xf32> to vector<32x8xf32>
    %cst_97 = arith.constant dense<0.000000e+00> : vector<32x8xf32>
    %105 = tpu.matmul %1, %104, %cst_97 {dimension_numbers = #tpu.dot_dimension_numbers<[1], [0], [0], [1], [0, 0, 1, 1], [], []>} : vector<32x32xf32>, vector<32x8xf32>, vector<32x8xf32> -> vector<32x8xf32>
    %cst_98 = arith.constant dense<0.000000e+00> : vector<16x32xf32>
    %106 = tpu.matmul %99, %102, %cst_98 {dimension_numbers = #tpu.dot_dimension_numbers<[1], [1], [0], [0], [0, 0, 1, 0], [], []>} : vector<16x8xf32>, vector<32x8xf32>, vector<16x32xf32> -> vector<16x32xf32>
    %107 = arith.addf %106, %3 : vector<16x32xf32>
    %cst_99 = arith.constant dense<0xFF800000> : vector<16xf32>
    %108 = vector.multi_reduction <maximumf>, %107, %cst_99 [1] : vector<16x32xf32> to vector<16xf32>
    %109 = vector.shape_cast %108 : vector<16xf32> to vector<16x1xf32>
    %110 = vector.broadcast %109 : vector<16x1xf32> to vector<16x32xf32>
    %111 = arith.subf %107, %110 : vector<16x32xf32>
    %112 = math.exp %111 : vector<16x32xf32>
    %cst_100 = arith.constant dense<0.000000e+00> : vector<16xf32>
    %113 = vector.multi_reduction <add>, %112, %cst_100 [1] : vector<16x32xf32> to vector<16xf32>
    %114 = vector.shape_cast %113 : vector<16xf32> to vector<16x1xf32>
    %115 = tpu.reciprocal %114 {approx = true} : vector<16x1xf32> -> vector<16x1xf32>
    %cst_101 = arith.constant dense<0.000000e+00> : vector<16x8xf32>
    %116 = tpu.matmul %112, %105, %cst_101 {dimension_numbers = #tpu.dot_dimension_numbers<[1], [0], [0], [1], [0, 0, 1, 1], [], []>} : vector<16x32xf32>, vector<32x8xf32>, vector<16x8xf32> -> vector<16x8xf32>
    %117 = vector.broadcast %115 : vector<16x1xf32> to vector<16x8xf32>
    %118 = arith.mulf %116, %117 : vector<16x8xf32>
    %c3_102 = arith.constant 3 : index
    %c0_103 = arith.constant 0 : index
    %c0_104 = arith.constant 0 : index
    %119 = vector.load %arg6[%c3_102, %c0_103, %c0_104] : memref<4x8x32xf32, #tpu.memory_space<vmem>>, vector<1x8x32xf32>
    %120 = vector.shape_cast %119 : vector<1x8x32xf32> to vector<8x32xf32>
    %cst_105 = arith.constant dense<0.000000e+00> : vector<16x32xf32>
    %121 = tpu.matmul %118, %120, %cst_105 {dimension_numbers = #tpu.dot_dimension_numbers<[1], [0], [0], [1], [0, 0, 1, 1], [], []>} : vector<16x8xf32>, vector<8x32xf32>, vector<16x32xf32> -> vector<16x32xf32>
    %122 = arith.addf %92, %121 : vector<16x32xf32>
    %c0_106 = arith.constant 0 : index
    %c0_107 = arith.constant 0 : index
    %123 = vector.load %arg7[%c0_106, %c0_107] : memref<3x32xf32, #tpu.memory_space<vmem>>, vector<1x32xf32>
    %c1_108 = arith.constant 1 : index
    %c0_109 = arith.constant 0 : index
    %124 = vector.load %arg7[%c1_108, %c0_109] : memref<3x32xf32, #tpu.memory_space<vmem>>, vector<1x32xf32>
    %c2_110 = arith.constant 2 : index
    %c0_111 = arith.constant 0 : index
    %125 = vector.load %arg7[%c2_110, %c0_111] : memref<3x32xf32, #tpu.memory_space<vmem>>, vector<1x32xf32>
    %126 = vector.broadcast %123 : vector<1x32xf32> to vector<16x32xf32>
    %127 = arith.addf %122, %126 : vector<16x32xf32>
    %128 = arith.addf %127, %0 : vector<16x32xf32>
    %cst_112 = arith.constant dense<0.000000e+00> : vector<16xf32>
    %129 = vector.multi_reduction <add>, %128, %cst_112 [1] : vector<16x32xf32> to vector<16xf32>
    %130 = vector.shape_cast %129 : vector<16xf32> to vector<16x1xf32>
    %cst_113 = arith.constant 3.200000e+01 : f32
    %131 = vector.broadcast %cst_113 : f32 to vector<16x1xf32>
    %132 = arith.divf %130, %131 : vector<16x1xf32>
    %133 = vector.broadcast %132 : vector<16x1xf32> to vector<16x32xf32>
    %134 = arith.subf %128, %133 : vector<16x32xf32>
    %135 = arith.mulf %134, %134 : vector<16x32xf32>
    %cst_114 = arith.constant dense<0.000000e+00> : vector<16xf32>
    %136 = vector.multi_reduction <add>, %135, %cst_114 [1] : vector<16x32xf32> to vector<16xf32>
    %137 = vector.shape_cast %136 : vector<16xf32> to vector<16x1xf32>
    %cst_115 = arith.constant 3.200000e+01 : f32
    %138 = vector.broadcast %cst_115 : f32 to vector<16x1xf32>
    %139 = arith.divf %137, %138 : vector<16x1xf32>
    %140 = vector.broadcast %132 : vector<16x1xf32> to vector<16x32xf32>
    %141 = arith.subf %128, %140 : vector<16x32xf32>
    %cst_116 = arith.constant 9.99999996E-13 : f32
    %142 = vector.broadcast %cst_116 : f32 to vector<16x1xf32>
    %143 = arith.addf %139, %142 : vector<16x1xf32>
    %144 = math.rsqrt %143 : vector<16x1xf32>
    %145 = vector.broadcast %144 : vector<16x1xf32> to vector<16x32xf32>
    %146 = arith.mulf %141, %145 : vector<16x32xf32>
    %147 = vector.broadcast %124 : vector<1x32xf32> to vector<16x32xf32>
    %148 = arith.mulf %146, %147 : vector<16x32xf32>
    %149 = vector.broadcast %125 : vector<1x32xf32> to vector<16x32xf32>
    %150 = arith.addf %148, %149 : vector<16x32xf32>
    %c0_117 = arith.constant 0 : index
    %c0_118 = arith.constant 0 : index
    %151 = vector.load %arg8[%c0_117, %c0_118] : memref<16x32xf32, #tpu.memory_space<vmem>>, vector<16x32xf32>
    tpu.vector_store %arg8[%c0_117, %c0_118], %150 {strides = array<i32>} : memref<16x32xf32, #tpu.memory_space<vmem>>, vector<16x32xf32>,
    return
  }
  func.func @transform_0(%arg0: i32) -> (i32, i32) {
    %c0_i32 = arith.constant 0 : i32
    %c0_i32_0 = arith.constant 0 : i32
    return %arg0, %c0_i32 : i32, i32
  }
  func.func @transform_1(%arg0: i32) -> (i32, i32) {
    %c0_i32 = arith.constant 0 : i32
    %c0_i32_0 = arith.constant 0 : i32
    return %arg0, %c0_i32 : i32, i32
  }
  func.func @transform_2(%arg0: i32) -> (i32, i32, i32) {
    %c0_i32 = arith.constant 0 : i32
    %c0_i32_0 = arith.constant 0 : i32
    %c0_i32_1 = arith.constant 0 : i32
    return %arg0, %c0_i32, %c0_i32_0 : i32, i32, i32
  }
  func.func @transform_3(%arg0: i32) -> (i32, i32, i32, i32) {
    %c0_i32 = arith.constant 0 : i32
    %c0_i32_0 = arith.constant 0 : i32
    %c0_i32_1 = arith.constant 0 : i32
    %c0_i32_2 = arith.constant 0 : i32
    %c0_i32_3 = arith.constant 0 : i32
    return %c0_i32, %c0_i32_0, %c0_i32_1, %c0_i32_2 : i32, i32, i32, i32
  }
  func.func @transform_4(%arg0: i32) -> (i32, i32, i32) {
    %c0_i32 = arith.constant 0 : i32
    %c0_i32_0 = arith.constant 0 : i32
    %c0_i32_1 = arith.constant 0 : i32
    %c0_i32_2 = arith.constant 0 : i32
    return %c0_i32, %c0_i32_0, %c0_i32_1 : i32, i32, i32
  }
  func.func @transform_5(%arg0: i32) -> (i32, i32, i32) {
    %c0_i32 = arith.constant 0 : i32
    %c0_i32_0 = arith.constant 0 : i32
    %c0_i32_1 = arith.constant 0 : i32
    %c0_i32_2 = arith.constant 0 : i32
    return %c0_i32, %c0_i32_0, %c0_i32_1 : i32, i32, i32
  }
  func.func @transform_6(%arg0: i32) -> (i32, i32) {
    %c0_i32 = arith.constant 0 : i32
    %c0_i32_0 = arith.constant 0 : i32
    %c0_i32_1 = arith.constant 0 : i32
    return %c0_i32, %c0_i32_0 : i32, i32
  }
  func.func @transform_7(%arg0: i32) -> (i32, i32) {
    %c0_i32 = arith.constant 0 : i32
    %c0_i32_0 = arith.constant 0 : i32
    return %arg0, %c0_i32 : i32, i32
  }
}

</mosaic_0001>

<llo_original>
// kernel: tpu_custom_call.1
$region0: #{tpu_custom_call.1}
  #allocation0 [shape = 'u32[]', space=smem, size = 0x4, offset = 0x4, fixed_abs, tag = 'smem constant byte address 0x4 - core index']
  #allocation1 [shape = 'u32[144,128]{1,0:T(1,128)}', space=vmem, size = 0x12000, scoped, tag = 'internal scratch']
  %s0 = inlined_call_operand.vmem [shape: f32[16,32], index: 0, kind: input, shape index: {}]
  %s1 = inlined_call_operand.vmem [shape: f32[32,32], index: 1, kind: input, shape index: {}]
  %s2 = inlined_call_operand.vmem [shape: f32[1,16,32], index: 2, kind: input, shape index: {}]
  %s3 = inlined_call_operand.vmem [shape: f32[3,4,32,8], index: 3, kind: input, shape index: {}]
  %s4 = inlined_call_operand.vmem [shape: f32[4,1,8], index: 4, kind: input, shape index: {}]
  %s5 = inlined_call_operand.vmem [shape: f32[4,8,32], index: 5, kind: input, shape index: {}]
  %s6 = inlined_call_operand.vmem [shape: f32[3,32], index: 6, kind: input, shape index: {}]
  %s7 = inlined_call_operand.hbm [shape: f32[16,32], index: 7, kind: output, shape index: {}]
  %s8 = sld [smem:[#allocation0]]
  $region38: #{tpu_custom_call.1} parent=0
    _
  %s10 = ssub.s32 1, %s8
  %s11 = scalar_select 0, %s10, %s8
  $region1: #{tpu_custom_call.1} parent=0
    #allocation2 [shape = 'u8[8192]{0}', space=vmem, size = 0x2000, scoped, tag = 'output window, operand 0, single buffered']
    #allocation3 [shape = 's32[1]{0}', space=sflag, size = 0x4, scoped, tag = 'scoped memory for tpu_custom_call.1']
    %12 = vsyncpa [#allocation3], 0
    // Predicated region
    $region2: #{tpu_custom_call.1} parent=1 // pred_check
      _
    $region3: #{tpu_custom_call.1} parent=1 // pred_check_branch
      %14 = sbr.rel (0) target = $region5
    $region4: #{tpu_custom_call.1} parent=1 // pred_region
      _
    $region5: #{tpu_custom_call.1} parent=1 // pred_fallthru
      _
    // Predicated region
    $region6: #{tpu_custom_call.1} parent=1 // pred_check
      _
    $region7: #{tpu_custom_call.1} parent=1 // pred_check_branch
      %16 = sbr.rel (0) target = $region9
    $region8: #{tpu_custom_call.1} parent=1 // pred_region
      _
    $region9: #{tpu_custom_call.1} parent=1 // pred_fallthru
      _
    // Predicated region
    $region10: #{tpu_custom_call.1} parent=1 // pred_check
      _
    $region11: #{tpu_custom_call.1} parent=1 // pred_check_branch
      %18 = sbr.rel (0) target = $region13
    $region12: #{tpu_custom_call.1} parent=1 // pred_region
      _
    $region13: #{tpu_custom_call.1} parent=1 // pred_fallthru
      _
    // Predicated region
    $region14: #{tpu_custom_call.1} parent=1 // pred_check
      _
    $region15: #{tpu_custom_call.1} parent=1 // pred_check_branch
      %20 = sbr.rel (0) target = $region17
    $region16: #{tpu_custom_call.1} parent=1 // pred_region
      _
    $region17: #{tpu_custom_call.1} parent=1 // pred_fallthru
      _
    // Predicated region
    $region18: #{tpu_custom_call.1} parent=1 // pred_check
      _
    $region19: #{tpu_custom_call.1} parent=1 // pred_check_branch
      %22 = sbr.rel (0) target = $region21
    $region20: #{tpu_custom_call.1} parent=1 // pred_region
      _
    $region21: #{tpu_custom_call.1} parent=1 // pred_fallthru
      _
    // Predicated region
    $region22: #{tpu_custom_call.1} parent=1 // pred_check
      _
    $region23: #{tpu_custom_call.1} parent=1 // pred_check_branch
      %24 = sbr.rel (0) target = $region25
    $region24: #{tpu_custom_call.1} parent=1 // pred_region
      _
    $region25: #{tpu_custom_call.1} parent=1 // pred_fallthru
      _
    // Predicated region
    $region26: #{tpu_custom_call.1} parent=1 // pred_check
      _
    $region27: #{tpu_custom_call.1} parent=1 // pred_check_branch
      %26 = sbr.rel (0) target = $region29
    $region28: #{tpu_custom_call.1} parent=1 // pred_region
      _
    $region29: #{tpu_custom_call.1} parent=1 // pred_fallthru
      _
    %v27 = vld [vmem:[%s0] sm:$0xff]
    %v28 = vld [vmem:[%s0 + $0x8] sm:$0xff]
    %v29 = vld [vmem:[%s1] sm:$0xff]
    %v30 = vld [vmem:[%s1 + $0x8] sm:$0xff]
    %v31 = vld [vmem:[%s1 + $0x10] sm:$0xff]
    %v32 = vld [vmem:[%s1 + $0x18] sm:$0xff]
    %v33 = vld [vmem:[%s2] sm:$0xff]
    %v34 = vld [vmem:[%s2 + $0x8] sm:$0xff]
    %v35 = vld [vmem:[%s3] sm:$0xff]
    %v36 = vld [vmem:[%s3 + $0x8] sm:$0xff]
    %v37 = vld [vmem:[%s3 + $0x10] sm:$0xff]
    %v38 = vld [vmem:[%s3 + $0x18] sm:$0xff]
    %v39 = vld [vmem:[%s4] sm:$0x1]
    %v41 = vlaneseq
    %v42 = vshrl.u32 %v41, 7
    %v43 = vsub.s32 0, %v42
    %v44 = vrot.slane %v39, %v43
    %vm46 = vcmask 261120
    %v48 = vsel %vm46, %v27, 0
    %v51 = vsel %vm46, %v28, 0
    %53 = vmatprep.subr.mxu0 0.0
    %54 = vmatpush1.msra.mxu0 %v35
    %55 = vmatprep.subr.mxu0 0.0
    %56 = vmatpush1.msra.mxu0 %v36
    %57 = vmatprep.subr.mxu0 0.0
    %58 = vmatpush1.msra.mxu0 %v37
    %59 = vmatprep.subr.mxu0 0.0
    %60 = vmatpush1.msra.mxu0 %v38
    %61 = vmatprep.subr.mxu0 0.0
    %62 = vmatpush1.msra.mxu0 0.0
    %63 = vmatprep.subr.mxu0 0.0
    %64 = vmatpush1.msra.mxu0 0.0
    %65 = vmatprep.subr.mxu0 0.0
    %66 = vmatpush1.msra.mxu0 0.0
    %67 = vmatprep.subr.mxu0 0.0
    %68 = vmatpush1.msra.mxu0 0.0
    %69 = vmatprep.subr.mxu0 0.0
    %70 = vmatpush1.msra.mxu0 0.0
    %71 = vmatprep.subr.mxu0 0.0
    %72 = vmatpush1.msra.mxu0 0.0
    %73 = vmatprep.subr.mxu0 0.0
    %74 = vmatpush1.msra.mxu0 0.0
    %75 = vmatprep.subr.mxu0 0.0
    %76 = vmatpush1.msra.mxu0 0.0
    %77 = vmatprep.subr.mxu0 0.0
    %78 = vmatpush1.msra.mxu0 0.0
    %79 = vmatprep.subr.mxu0 0.0
    %80 = vmatpush1.msra.mxu0 0.0
    %81 = vmatprep.subr.mxu0 0.0
    %82 = vmatpush1.msra.mxu0 0.0
    %83 = vmatprep.subr.mxu0 0.0
    %84 = vmatpush1.msra.mxu0 0.0
    %85 = vmatprep.subr.mxu0 0.0
    %86 = vmatpush1.msra.mxu0 0.0
    %87 = vmatprep.subr.mxu0 0.0
    %88 = vmatpush1.msra.mxu0 0.0
    %89 = vmatprep.subr.mxu0 0.0
    %90 = vmatpush1.msra.mxu0 0.0
    %91 = vmatprep.subr.mxu0 0.0
    %92 = vmatpush1.msra.mxu0 0.0
    %93 = vmatprep.subr.mxu0 0.0
    %94 = vmatpush1.msra.mxu0 0.0
    %95 = vmatprep.subr.mxu0 0.0
    %96 = vmatpush1.msra.mxu0 0.0
    %97 = vmatprep.subr.mxu0 0.0
    %98 = vmatpush1.msra.mxu0 0.0
    %99 = vmatprep.subr.mxu0 0.0
    %100 = vmatpush1.msra.mxu0 0.0
    %101 = vmatprep.subr.mxu0 0.0
    %102 = vmatpush1.msra.mxu0 0.0
    %103 = vmatprep.subr.mxu0 0.0
    %104 = vmatpush1.msra.mxu0 0.0
    %105 = vmatprep.subr.mxu0 0.0
    %106 = vmatpush1.msra.mxu0 0.0
    %107 = vmatprep.subr.mxu0 0.0
    %108 = vmatpush1.msra.mxu0 0.0
    %109 = vmatprep.subr.mxu0 0.0
    %110 = vmatpush1.msra.mxu0 0.0
    %111 = vmatprep.subr.mxu0 0.0
    %112 = vmatpush1.msra.mxu0 0.0
    %113 = vmatprep.subr.mxu0 0.0
    %114 = vmatpush1.msra.mxu0 0.0
    %115 = vmatprep.subr.mxu0 0.0
    %116 = vmatpush1.msra.mxu0 0.0
    %117 = vmatprep.mubr.f32.mxu0 0.0
    %118 = vmatmul.mubr.f32.gmra.mrb[0].mxu0 %v48
    %v119 = vpop.f32.mrb[0].mxu0
    %v120 = vadd.f32 %v44, %v119
    %v121 = vpop.f32.mrb[0].mxu0
    %122 = vmatprep.mubr.f32.mxu0 0.0
    %123 = vmatmul.mubr.f32.gmra.mrb[0].mxu0 %v51
    %v124 = vpop.f32.mrb[0].mxu0
    %v125 = vadd.f32 %v44, %v124
    %v126 = vpop.f32.mrb[0].mxu0
    %127 = vdwg.mxu0
    %s128 = scalar_lea.vmem %s3, 128
    %v129 = vld [vmem:[%s128] sm:$0xff]
    %v130 = vld [vmem:[%s128 + $0x8] sm:$0xff]
    %v131 = vld [vmem:[%s128 + $0x10] sm:$0xff]
    %v132 = vld [vmem:[%s128 + $0x18] sm:$0xff]
    %v134 = vsel %vm46, %v29, 0
    %v137 = vsel %vm46, %v30, 0
    %v140 = vsel %vm46, %v31, 0
    %v143 = vsel %vm46, %v32, 0
    %145 = vmatprep.subr.mxu0 0.0
    %146 = vmatpush1.msra.mxu0 %v129
    %147 = vmatprep.subr.mxu0 0.0
    %148 = vmatpush1.msra.mxu0 %v130
    %149 = vmatprep.subr.mxu0 0.0
    %150 = vmatpush1.msra.mxu0 %v131
    %151 = vmatprep.subr.mxu0 0.0
    %152 = vmatpush1.msra.mxu0 %v132
    %153 = vmatprep.subr.mxu0 0.0
    %154 = vmatpush1.msra.mxu0 0.0
    %155 = vmatprep.subr.mxu0 0.0
    %156 = vmatpush1.msra.mxu0 0.0
    %157 = vmatprep.subr.mxu0 0.0
    %158 = vmatpush1.msra.mxu0 0.0
    %159 = vmatprep.subr.mxu0 0.0
    %160 = vmatpush1.msra.mxu0 0.0
    %161 = vmatprep.subr.mxu0 0.0
    %162 = vmatpush1.msra.mxu0 0.0
    %163 = vmatprep.subr.mxu0 0.0
    %164 = vmatpush1.msra.mxu0 0.0
    %165 = vmatprep.subr.mxu0 0.0
    %166 = vmatpush1.msra.mxu0 0.0
    %167 = vmatprep.subr.mxu0 0.0
    %168 = vmatpush1.msra.mxu0 0.0
    %169 = vmatprep.subr.mxu0 0.0
    %170 = vmatpush1.msra.mxu0 0.0
    %171 = vmatprep.subr.mxu0 0.0
    %172 = vmatpush1.msra.mxu0 0.0
    %173 = vmatprep.subr.mxu0 0.0
    %174 = vmatpush1.msra.mxu0 0.0
    %175 = vmatprep.subr.mxu0 0.0
    %176 = vmatpush1.msra.mxu0 0.0
    %177 = vmatprep.subr.mxu0 0.0
    %178 = vmatpush1.msra.mxu0 0.0
    %179 = vmatprep.subr.mxu0 0.0
    %180 = vmatpush1.msra.mxu0 0.0
    %181 = vmatprep.subr.mxu0 0.0
    %182 = vmatpush1.msra.mxu0 0.0
    %183 = vmatprep.subr.mxu0 0.0
    %184 = vmatpush1.msra.mxu0 0.0
    %185 = vmatprep.subr.mxu0 0.0
    %186 = vmatpush1.msra.mxu0 0.0
    %187 = vmatprep.subr.mxu0 0.0
    %188 = vmatpush1.msra.mxu0 0.0
    %189 = vmatprep.subr.mxu0 0.0
    %190 = vmatpush1.msra.mxu0 0.0
    %191 = vmatprep.subr.mxu0 0.0
    %192 = vmatpush1.msra.mxu0 0.0
    %193 = vmatprep.subr.mxu0 0.0
    %194 = vmatpush1.msra.mxu0 0.0
    %195 = vmatprep.subr.mxu0 0.0
    %196 = vmatpush1.msra.mxu0 0.0
    %197 = vmatprep.subr.mxu0 0.0
    %198 = vmatpush1.msra.mxu0 0.0
    %199 = vmatprep.subr.mxu0 0.0
    %200 = vmatpush1.msra.mxu0 0.0
    %201 = vmatprep.subr.mxu0 0.0
    %202 = vmatpush1.msra.mxu0 0.0
    %203 = vmatprep.subr.mxu0 0.0
    %204 = vmatpush1.msra.mxu0 0.0
    %205 = vmatprep.subr.mxu0 0.0
    %206 = vmatpush1.msra.mxu0 0.0
    %207 = vmatprep.subr.mxu0 0.0
    %208 = vmatpush1.msra.mxu0 0.0
    %209 = vmatprep.mubr.f32.mxu0 0.0
    %210 = vmatmul.mubr.f32.gmra.mrb[0].mxu0 %v134
    %v211 = vpop.f32.mrb[0].mxu0
    %v212 = vadd.f32 0.0, %v211
    %v213 = vpop.f32.mrb[0].mxu0
    %214 = vmatprep.mubr.f32.mxu0 0.0
    %215 = vmatmul.mubr.f32.gmra.mrb[0].mxu0 %v137
    %v216 = vpop.f32.mrb[0].mxu0
    %v217 = vadd.f32 0.0, %v216
    %v218 = vpop.f32.mrb[0].mxu0
    %219 = vmatprep.mubr.f32.mxu0 0.0
    %220 = vmatmul.mubr.f32.gmra.mrb[0].mxu0 %v140
    %v221 = vpop.f32.mrb[0].mxu0
    %v222 = vadd.f32 0.0, %v221
    %v223 = vpop.f32.mrb[0].mxu0
    %224 = vmatprep.mubr.f32.mxu0 0.0
    %225 = vmatmul.mubr.f32.gmra.mrb[0].mxu0 %v143
    %v226 = vpop.f32.mrb[0].mxu0
    %v227 = vadd.f32 0.0, %v226
    %v228 = vpop.f32.mrb[0].mxu0
    %229 = vdwg.mxu0
    %s230 = scalar_lea.vmem %s3, 256
    %v231 = vld [vmem:[%s230] sm:$0xff]
    %v232 = vld [vmem:[%s230 + $0x8] sm:$0xff]
    %v233 = vld [vmem:[%s230 + $0x10] sm:$0xff]
    %v234 = vld [vmem:[%s230 + $0x18] sm:$0xff]
    %235 = vmatprep.subr.mxu0 0.0
    %236 = vmatpush1.msra.mxu0 %v231
    %237 = vmatprep.subr.mxu0 0.0
    %238 = vmatpush1.msra.mxu0 %v232
    %239 = vmatprep.subr.mxu0 0.0
    %240 = vmatpush1.msra.mxu0 %v233
    %241 = vmatprep.subr.mxu0 0.0
    %242 = vmatpush1.msra.mxu0 %v234
    %243 = vmatprep.subr.mxu0 0.0
    %244 = vmatpush1.msra.mxu0 0.0
    %245 = vmatprep.subr.mxu0 0.0
    %246 = vmatpush1.msra.mxu0 0.0
    %247 = vmatprep.subr.mxu0 0.0
    %248 = vmatpush1.msra.mxu0 0.0
    %249 = vmatprep.subr.mxu0 0.0
    %250 = vmatpush1.msra.mxu0 0.0
    %251 = vmatprep.subr.mxu0 0.0
    %252 = vmatpush1.msra.mxu0 0.0
    %253 = vmatprep.subr.mxu0 0.0
    %254 = vmatpush1.msra.mxu0 0.0
    %255 = vmatprep.subr.mxu0 0.0
    %256 = vmatpush1.msra.mxu0 0.0
    %257 = vmatprep.subr.mxu0 0.0
    %258 = vmatpush1.msra.mxu0 0.0
    %259 = vmatprep.subr.mxu0 0.0
    %260 = vmatpush1.msra.mxu0 0.0
    %261 = vmatprep.subr.mxu0 0.0
    %262 = vmatpush1.msra.mxu0 0.0
    %263 = vmatprep.subr.mxu0 0.0
    %264 = vmatpush1.msra.mxu0 0.0
    %265 = vmatprep.subr.mxu0 0.0
    %266 = vmatpush1.msra.mxu0 0.0
    %267 = vmatprep.subr.mxu0 0.0
    %268 = vmatpush1.msra.mxu0 0.0
    %269 = vmatprep.subr.mxu0 0.0
    %270 = vmatpush1.msra.mxu0 0.0
    %271 = vmatprep.subr.mxu0 0.0
    %272 = vmatpush1.msra.mxu0 0.0
    %273 = vmatprep.subr.mxu0 0.0
    %274 = vmatpush1.msra.mxu0 0.0
    %275 = vmatprep.subr.mxu0 0.0
    %276 = vmatpush1.msra.mxu0 0.0
    %277 = vmatprep.subr.mxu0 0.0
    %278 = vmatpush1.msra.mxu0 0.0
    %279 = vmatprep.subr.mxu0 0.0
    %280 = vmatpush1.msra.mxu0 0.0
    %281 = vmatprep.subr.mxu0 0.0
    %282 = vmatpush1.msra.mxu0 0.0
    %283 = vmatprep.subr.mxu0 0.0
    %284 = vmatpush1.msra.mxu0 0.0
    %285 = vmatprep.subr.mxu0 0.0
    %286 = vmatpush1.msra.mxu0 0.0
    %287 = vmatprep.subr.mxu0 0.0
    %288 = vmatpush1.msra.mxu0 0.0
    %289 = vmatprep.subr.mxu0 0.0
    %290 = vmatpush1.msra.mxu0 0.0
    %291 = vmatprep.subr.mxu0 0.0
    %292 = vmatpush1.msra.mxu0 0.0
    %293 = vmatprep.subr.mxu0 0.0
    %294 = vmatpush1.msra.mxu0 0.0
    %295 = vmatprep.subr.mxu0 0.0
    %296 = vmatpush1.msra.mxu0 0.0
    %297 = vmatprep.subr.mxu0 0.0
    %298 = vmatpush1.msra.mxu0 0.0
    %299 = vmatprep.mubr.f32.mxu0 0.0
    %300 = vmatmul.mubr.f32.gmra.mrb[0].mxu0 %v134
    %v301 = vpop.f32.mrb[0].mxu0
    %v302 = vadd.f32 0.0, %v301
    %v303 = vpop.f32.mrb[0].mxu0
    %304 = vmatprep.mubr.f32.mxu0 0.0
    %305 = vmatmul.mubr.f32.gmra.mrb[0].mxu0 %v137
    %v306 = vpop.f32.mrb[0].mxu0
    %v307 = vadd.f32 0.0, %v306
    %v308 = vpop.f32.mrb[0].mxu0
    %309 = vmatprep.mubr.f32.mxu0 0.0
    %310 = vmatmul.mubr.f32.gmra.mrb[0].mxu0 %v140
    %v311 = vpop.f32.mrb[0].mxu0
    %v312 = vadd.f32 0.0, %v311
    %v313 = vpop.f32.mrb[0].mxu0
    %314 = vmatprep.mubr.f32.mxu0 0.0
    %315 = vmatmul.mubr.f32.gmra.mrb[0].mxu0 %v143
    %v316 = vpop.f32.mrb[0].mxu0
    %v317 = vadd.f32 0.0, %v316
    %v318 = vpop.f32.mrb[0].mxu0
    %319 = vdwg.mxu0
    %vm320 = vcmask 64512
    %v322 = vsel %vm320, %v120, 0
    %v325 = vsel %vm320, %v125, 0
    %v328 = vsel %vm320, %v212, 0
    %v331 = vsel %vm320, %v217, 0
    %v334 = vsel %vm320, %v222, 0
    %v337 = vsel %vm320, %v227, 0
    %339 = vmatprep.subr.mxu0 0.0
    %340 = vmatpush1.xpose.msra.mxu0 %v328
    %341 = vmatprep.subr.mxu0 0.0
    %342 = vmatpush1.xpose.msra.mxu0 %v331
    %343 = vmatprep.subr.mxu0 0.0
    %344 = vmatpush1.xpose.msra.mxu0 %v334
    %345 = vmatprep.subr.mxu0 0.0
    %346 = vmatpush1.xpose.msra.mxu0 %v337
    %347 = vmatprep.subr.mxu0 0.0
    %348 = vmatpush1.xpose.msra.mxu0 0.0
    %349 = vmatprep.subr.mxu0 0.0
    %350 = vmatpush1.xpose.msra.mxu0 0.0
    %351 = vmatprep.subr.mxu0 0.0
    %352 = vmatpush1.xpose.msra.mxu0 0.0
    %353 = vmatprep.subr.mxu0 0.0
    %354 = vmatpush1.xpose.msra.mxu0 0.0
    %355 = vmatprep.subr.mxu0 0.0
    %356 = vmatpush1.xpose.msra.mxu0 0.0
    %357 = vmatprep.subr.mxu0 0.0
    %358 = vmatpush1.xpose.msra.mxu0 0.0
    %359 = vmatprep.subr.mxu0 0.0
    %360 = vmatpush1.xpose.msra.mxu0 0.0
    %361 = vmatprep.subr.mxu0 0.0
    %362 = vmatpush1.xpose.msra.mxu0 0.0
    %363 = vmatprep.subr.mxu0 0.0
    %364 = vmatpush1.xpose.msra.mxu0 0.0
    %365 = vmatprep.subr.mxu0 0.0
    %366 = vmatpush1.xpose.msra.mxu0 0.0
    %367 = vmatprep.subr.mxu0 0.0
    %368 = vmatpush1.xpose.msra.mxu0 0.0
    %369 = vmatprep.subr.mxu0 0.0
    %370 = vmatpush1.xpose.msra.mxu0 0.0
    %371 = vmatprep.subr.mxu0 0.0
    %372 = vmatpush1.xpose.msra.mxu0 0.0
    %373 = vmatprep.subr.mxu0 0.0
    %374 = vmatpush1.xpose.msra.mxu0 0.0
    %375 = vmatprep.subr.mxu0 0.0
    %376 = vmatpush1.xpose.msra.mxu0 0.0
    %377 = vmatprep.subr.mxu0 0.0
    %378 = vmatpush1.xpose.msra.mxu0 0.0
    %379 = vmatprep.subr.mxu0 0.0
    %380 = vmatpush1.xpose.msra.mxu0 0.0
    %381 = vmatprep.subr.mxu0 0.0
    %382 = vmatpush1.xpose.msra.mxu0 0.0
    %383 = vmatprep.subr.mxu0 0.0
    %384 = vmatpush1.xpose.msra.mxu0 0.0
    %385 = vmatprep.subr.mxu0 0.0
    %386 = vmatpush1.xpose.msra.mxu0 0.0
    %387 = vmatprep.subr.mxu0 0.0
    %388 = vmatpush1.xpose.msra.mxu0 0.0
    %389 = vmatprep.subr.mxu0 0.0
    %390 = vmatpush1.xpose.msra.mxu0 0.0
    %391 = vmatprep.subr.mxu0 0.0
    %392 = vmatpush1.xpose.msra.mxu0 0.0
    %393 = vmatprep.subr.mxu0 0.0
    %394 = vmatpush1.xpose.msra.mxu0 0.0
    %395 = vmatprep.subr.mxu0 0.0
    %396 = vmatpush1.xpose.msra.mxu0 0.0
    %397 = vmatprep.subr.mxu0 0.0
    %398 = vmatpush1.xpose.msra.mxu0 0.0
    %399 = vmatprep.subr.mxu0 0.0
    %400 = vmatpush1.xpose.msra.mxu0 0.0
    %401 = vmatprep.subr.mxu0 0.0
    %402 = vmatpush1.xpose.msra.mxu0 0.0
    %403 = vmatprep.mubr.f32.mxu0 0.0
    %404 = vmatmul.mubr.f32.gmra.mrb[0].mxu0 %v322
    %v405 = vpop.f32.mrb[0].mxu0
    %v406 = vadd.f32 %v33, %v405
    %v407 = vpop.f32.mrb[0].mxu0
    %408 = vmatprep.mubr.f32.mxu0 0.0
    %409 = vmatmul.mubr.f32.gmra.mrb[0].mxu0 %v325
    %v410 = vpop.f32.mrb[0].mxu0
    %v411 = vadd.f32 %v34, %v410
    %v412 = vpop.f32.mrb[0].mxu0
    %413 = vdwg.mxu0
    %v414 = vsel %vm46, %v406, -inf
    %415 = vmax.xlane.f32.xlu0 %v414
    %v416 = vpop.xlane.xlu0 %415
    %v417 = vsel %vm46, %v411, -inf
    %418 = vmax.xlane.f32.xlu0 %v417
    %v419 = vpop.xlane.xlu0 %418
    %v420 = vsub.f32 %v406, %v416
    %v421 = vsub.f32 %v411, %v419
    %v422 = vmul.f32 %v420, 1.442695
    %v423 = vpow.pop %v422
    %v424 = vmul.f32 %v421, 1.442695
    %v425 = vpow.pop %v424
    %v426 = vsel %vm46, %v423, 0.0
    %427 = vadd.xlane.f32.xlu0 %v426
    %v428 = vpop.xlane.xlu0 %427
    %v429 = vsel %vm46, %v425, 0.0
    %430 = vadd.xlane.f32.xlu0 %v429
    %v431 = vpop.xlane.xlu0 %430
    %v432 = vrcp.pop %v428
    %v433 = vrcp.pop %v431
    %v435 = vsel %vm46, %v423, 0
    %v438 = vsel %vm46, %v425, 0
    %440 = vmatprep.subr.mxu0 0.0
    %441 = vmatpush1.msra.mxu0 %v302
    %442 = vmatprep.subr.mxu0 0.0
    %443 = vmatpush1.msra.mxu0 %v307
    %444 = vmatprep.subr.mxu0 0.0
    %445 = vmatpush1.msra.mxu0 %v312
    %446 = vmatprep.subr.mxu0 0.0
    %447 = vmatpush1.msra.mxu0 %v317
    %448 = vmatprep.subr.mxu0 0.0
    %449 = vmatpush1.msra.mxu0 0.0
    %450 = vmatprep.subr.mxu0 0.0
    %451 = vmatpush1.msra.mxu0 0.0
    %452 = vmatprep.subr.mxu0 0.0
    %453 = vmatpush1.msra.mxu0 0.0
    %454 = vmatprep.subr.mxu0 0.0
    %455 = vmatpush1.msra.mxu0 0.0
    %456 = vmatprep.subr.mxu0 0.0
    %457 = vmatpush1.msra.mxu0 0.0
    %458 = vmatprep.subr.mxu0 0.0
    %459 = vmatpush1.msra.mxu0 0.0
    %460 = vmatprep.subr.mxu0 0.0
    %461 = vmatpush1.msra.mxu0 0.0
    %462 = vmatprep.subr.mxu0 0.0
    %463 = vmatpush1.msra.mxu0 0.0
    %464 = vmatprep.subr.mxu0 0.0
    %465 = vmatpush1.msra.mxu0 0.0
    %466 = vmatprep.subr.mxu0 0.0
    %467 = vmatpush1.msra.mxu0 0.0
    %468 = vmatprep.subr.mxu0 0.0
    %469 = vmatpush1.msra.mxu0 0.0
    %470 = vmatprep.subr.mxu0 0.0
    %471 = vmatpush1.msra.mxu0 0.0
    %472 = vmatprep.subr.mxu0 0.0
    %473 = vmatpush1.msra.mxu0 0.0
    %474 = vmatprep.subr.mxu0 0.0
    %475 = vmatpush1.msra.mxu0 0.0
    %476 = vmatprep.subr.mxu0 0.0
    %477 = vmatpush1.msra.mxu0 0.0
    %478 = vmatprep.subr.mxu0 0.0
    %479 = vmatpush1.msra.mxu0 0.0
    %480 = vmatprep.subr.mxu0 0.0
    %481 = vmatpush1.msra.mxu0 0.0
    %482 = vmatprep.subr.mxu0 0.0
    %483 = vmatpush1.msra.mxu0 0.0
    %484 = vmatprep.subr.mxu0 0.0
    %485 = vmatpush1.msra.mxu0 0.0
    %486 = vmatprep.subr.mxu0 0.0
    %487 = vmatpush1.msra.mxu0 0.0
    %488 = vmatprep.subr.mxu0 0.0
    %489 = vmatpush1.msra.mxu0 0.0
    %490 = vmatprep.subr.mxu0 0.0
    %491 = vmatpush1.msra.mxu0 0.0
    %492 = vmatprep.subr.mxu0 0.0
    %493 = vmatpush1.msra.mxu0 0.0
    %494 = vmatprep.subr.mxu0 0.0
    %495 = vmatpush1.msra.mxu0 0.0
    %496 = vmatprep.subr.mxu0 0.0
    %497 = vmatpush1.msra.mxu0 0.0
    %498 = vmatprep.subr.mxu0 0.0
    %499 = vmatpush1.msra.mxu0 0.0
    %500 = vmatprep.subr.mxu0 0.0
    %501 = vmatpush1.msra.mxu0 0.0
    %502 = vmatprep.subr.mxu0 0.0
    %503 = vmatpush1.msra.mxu0 0.0
    %504 = vmatprep.mubr.f32.mxu0 0.0
    %505 = vmatmul.mubr.f32.gmra.mrb[0].mxu0 %v435
    %v506 = vpop.f32.mrb[0].mxu0
    %v507 = vadd.f32 0.0, %v506
    %v508 = vpop.f32.mrb[0].mxu0
    %509 = vmatprep.mubr.f32.mxu0 0.0
    %510 = vmatmul.mubr.f32.gmra.mrb[0].mxu0 %v438
    %v511 = vpop.f32.mrb[0].mxu0
    %v512 = vadd.f32 0.0, %v511
    %v513 = vpop.f32.mrb[0].mxu0
    %514 = vdwg.mxu0
    %v515 = vmul.f32 %v507, %v432
    %v516 = vmul.f32 %v512, %v433
    %v517 = vld [vmem:[%s5] sm:$0xff]
    %s518 = scalar_lea.vmem %s3, 32
    %v519 = vld [vmem:[%s518] sm:$0xff]
    %v520 = vld [vmem:[%s518 + $0x8] sm:$0xff]
    %v521 = vld [vmem:[%s518 + $0x10] sm:$0xff]
    %v522 = vld [vmem:[%s518 + $0x18] sm:$0xff]
    %s523 = scalar_lea.vmem %s4, 1
    %v524 = vld [vmem:[%s523] sm:$0x1]
    %v526 = vlaneseq
    %v527 = vshrl.u32 %v526, 7
    %v528 = vsub.s32 0, %v527
    %v529 = vrot.slane %v524, %v528
    %531 = vmatprep.subr.mxu0 0.0
    %532 = vmatpush1.msra.mxu0 %v519
    %533 = vmatprep.subr.mxu0 0.0
    %534 = vmatpush1.msra.mxu0 %v520
    %535 = vmatprep.subr.mxu0 0.0
    %536 = vmatpush1.msra.mxu0 %v521
    %537 = vmatprep.subr.mxu0 0.0
    %538 = vmatpush1.msra.mxu0 %v522
    %539 = vmatprep.subr.mxu0 0.0
    %540 = vmatpush1.msra.mxu0 0.0
    %541 = vmatprep.subr.mxu0 0.0
    %542 = vmatpush1.msra.mxu0 0.0
    %543 = vmatprep.subr.mxu0 0.0
    %544 = vmatpush1.msra.mxu0 0.0
    %545 = vmatprep.subr.mxu0 0.0
    %546 = vmatpush1.msra.mxu0 0.0
    %547 = vmatprep.subr.mxu0 0.0
    %548 = vmatpush1.msra.mxu0 0.0
    %549 = vmatprep.subr.mxu0 0.0
    %550 = vmatpush1.msra.mxu0 0.0
    %551 = vmatprep.subr.mxu0 0.0
    %552 = vmatpush1.msra.mxu0 0.0
    %553 = vmatprep.subr.mxu0 0.0
    %554 = vmatpush1.msra.mxu0 0.0
    %555 = vmatprep.subr.mxu0 0.0
    %556 = vmatpush1.msra.mxu0 0.0
    %557 = vmatprep.subr.mxu0 0.0
    %558 = vmatpush1.msra.mxu0 0.0
    %559 = vmatprep.subr.mxu0 0.0
    %560 = vmatpush1.msra.mxu0 0.0
    %561 = vmatprep.subr.mxu0 0.0
    %562 = vmatpush1.msra.mxu0 0.0
    %563 = vmatprep.subr.mxu0 0.0
    %564 = vmatpush1.msra.mxu0 0.0
    %565 = vmatprep.subr.mxu0 0.0
    %566 = vmatpush1.msra.mxu0 0.0
    %567 = vmatprep.subr.mxu0 0.0
    %568 = vmatpush1.msra.mxu0 0.0
    %569 = vmatprep.subr.mxu0 0.0
    %570 = vmatpush1.msra.mxu0 0.0
    %571 = vmatprep.subr.mxu0 0.0
    %572 = vmatpush1.msra.mxu0 0.0
    %573 = vmatprep.subr.mxu0 0.0
    %574 = vmatpush1.msra.mxu0 0.0
    %575 = vmatprep.subr.mxu0 0.0
    %576 = vmatpush1.msra.mxu0 0.0
    %577 = vmatprep.subr.mxu0 0.0
    %578 = vmatpush1.msra.mxu0 0.0
    %579 = vmatprep.subr.mxu0 0.0
    %580 = vmatpush1.msra.mxu0 0.0
    %581 = vmatprep.subr.mxu0 0.0
    %582 = vmatpush1.msra.mxu0 0.0
    %583 = vmatprep.subr.mxu0 0.0
    %584 = vmatpush1.msra.mxu0 0.0
    %585 = vmatprep.subr.mxu0 0.0
    %586 = vmatpush1.msra.mxu0 0.0
    %587 = vmatprep.subr.mxu0 0.0
    %588 = vmatpush1.msra.mxu0 0.0
    %589 = vmatprep.subr.mxu0 0.0
    %590 = vmatpush1.msra.mxu0 0.0
    %591 = vmatprep.subr.mxu0 0.0
    %592 = vmatpush1.msra.mxu0 0.0
    %593 = vmatprep.subr.mxu0 0.0
    %594 = vmatpush1.msra.mxu0 0.0
    %595 = vmatprep.mubr.f32.mxu0 0.0
    %596 = vmatmul.mubr.f32.gmra.mrb[0].mxu0 %v48
    %v597 = vpop.f32.mrb[0].mxu0
    %v598 = vadd.f32 %v529, %v597
    %v599 = vpop.f32.mrb[0].mxu0
    %600 = vmatprep.mubr.f32.mxu0 0.0
    %601 = vmatmul.mubr.f32.gmra.mrb[0].mxu0 %v51
    %v602 = vpop.f32.mrb[0].mxu0
    %v603 = vadd.f32 %v529, %v602
    %v604 = vpop.f32.mrb[0].mxu0
    %605 = vdwg.mxu0
    %s606 = scalar_lea.vmem %s3, 160
    %v607 = vld [vmem:[%s606] sm:$0xff]
    %v608 = vld [vmem:[%s606 + $0x8] sm:$0xff]
    %v609 = vld [vmem:[%s606 + $0x10] sm:$0xff]
    %v610 = vld [vmem:[%s606 + $0x18] sm:$0xff]
    %611 = vmatprep.subr.mxu0 0.0
    %612 = vmatpush1.msra.mxu0 %v607
    %613 = vmatprep.subr.mxu0 0.0
    %614 = vmatpush1.msra.mxu0 %v608
    %615 = vmatprep.subr.mxu0 0.0
    %616 = vmatpush1.msra.mxu0 %v609
    %617 = vmatprep.subr.mxu0 0.0
    %618 = vmatpush1.msra.mxu0 %v610
    %619 = vmatprep.subr.mxu0 0.0
    %620 = vmatpush1.msra.mxu0 0.0
    %621 = vmatprep.subr.mxu0 0.0
    %622 = vmatpush1.msra.mxu0 0.0
    %623 = vmatprep.subr.mxu0 0.0
    %624 = vmatpush1.msra.mxu0 0.0
    %625 = vmatprep.subr.mxu0 0.0
    %626 = vmatpush1.msra.mxu0 0.0
    %627 = vmatprep.subr.mxu0 0.0
    %628 = vmatpush1.msra.mxu0 0.0
    %629 = vmatprep.subr.mxu0 0.0
    %630 = vmatpush1.msra.mxu0 0.0
    %631 = vmatprep.subr.mxu0 0.0
    %632 = vmatpush1.msra.mxu0 0.0
    %633 = vmatprep.subr.mxu0 0.0
    %634 = vmatpush1.msra.mxu0 0.0
    %635 = vmatprep.subr.mxu0 0.0
    %636 = vmatpush1.msra.mxu0 0.0
    %637 = vmatprep.subr.mxu0 0.0
    %638 = vmatpush1.msra.mxu0 0.0
    %639 = vmatprep.subr.mxu0 0.0
    %640 = vmatpush1.msra.mxu0 0.0
    %641 = vmatprep.subr.mxu0 0.0
    %642 = vmatpush1.msra.mxu0 0.0
    %643 = vmatprep.subr.mxu0 0.0
    %644 = vmatpush1.msra.mxu0 0.0
    %645 = vmatprep.subr.mxu0 0.0
    %646 = vmatpush1.msra.mxu0 0.0
    %647 = vmatprep.subr.mxu0 0.0
    %648 = vmatpush1.msra.mxu0 0.0
    %649 = vmatprep.subr.mxu0 0.0
    %650 = vmatpush1.msra.mxu0 0.0
    %651 = vmatprep.subr.mxu0 0.0
    %652 = vmatpush1.msra.mxu0 0.0
    %653 = vmatprep.subr.mxu0 0.0
    %654 = vmatpush1.msra.mxu0 0.0
    %655 = vmatprep.subr.mxu0 0.0
    %656 = vmatpush1.msra.mxu0 0.0
    %657 = vmatprep.subr.mxu0 0.0
    %658 = vmatpush1.msra.mxu0 0.0
    %659 = vmatprep.subr.mxu0 0.0
    %660 = vmatpush1.msra.mxu0 0.0
    %661 = vmatprep.subr.mxu0 0.0
    %662 = vmatpush1.msra.mxu0 0.0
    %663 = vmatprep.subr.mxu0 0.0
    %664 = vmatpush1.msra.mxu0 0.0
    %665 = vmatprep.subr.mxu0 0.0
    %666 = vmatpush1.msra.mxu0 0.0
    %667 = vmatprep.subr.mxu0 0.0
    %668 = vmatpush1.msra.mxu0 0.0
    %669 = vmatprep.subr.mxu0 0.0
    %670 = vmatpush1.msra.mxu0 0.0
    %671 = vmatprep.subr.mxu0 0.0
    %672 = vmatpush1.msra.mxu0 0.0
    %673 = vmatprep.subr.mxu0 0.0
    %674 = vmatpush1.msra.mxu0 0.0
    %675 = vmatprep.mubr.f32.mxu0 0.0
    %676 = vmatmul.mubr.f32.gmra.mrb[0].mxu0 %v134
    %v677 = vpop.f32.mrb[0].mxu0
    %v678 = vadd.f32 0.0, %v677
    %v679 = vpop.f32.mrb[0].mxu0
    %680 = vmatprep.mubr.f32.mxu0 0.0
    %681 = vmatmul.mubr.f32.gmra.mrb[0].mxu0 %v137
    %v682 = vpop.f32.mrb[0].mxu0
    %v683 = vadd.f32 0.0, %v682
    %v684 = vpop.f32.mrb[0].mxu0
    %685 = vmatprep.mubr.f32.mxu0 0.0
    %686 = vmatmul.mubr.f32.gmra.mrb[0].mxu0 %v140
    %v687 = vpop.f32.mrb[0].mxu0
    %v688 = vadd.f32 0.0, %v687
    %v689 = vpop.f32.mrb[0].mxu0
    %690 = vmatprep.mubr.f32.mxu0 0.0
    %691 = vmatmul.mubr.f32.gmra.mrb[0].mxu0 %v143
    %v692 = vpop.f32.mrb[0].mxu0
    %v693 = vadd.f32 0.0, %v692
    %v694 = vpop.f32.mrb[0].mxu0
    %695 = vdwg.mxu0
    %s696 = scalar_lea.vmem %s3, 288
    %v697 = vld [vmem:[%s696] sm:$0xff]
    %v698 = vld [vmem:[%s696 + $0x8] sm:$0xff]
    %v699 = vld [vmem:[%s696 + $0x10] sm:$0xff]
    %v700 = vld [vmem:[%s696 + $0x18] sm:$0xff]
    %701 = vmatprep.subr.mxu0 0.0
    %702 = vmatpush1.msra.mxu0 %v697
    %703 = vmatprep.subr.mxu0 0.0
    %704 = vmatpush1.msra.mxu0 %v698
    %705 = vmatprep.subr.mxu0 0.0
    %706 = vmatpush1.msra.mxu0 %v699
    %707 = vmatprep.subr.mxu0 0.0
    %708 = vmatpush1.msra.mxu0 %v700
    %709 = vmatprep.subr.mxu0 0.0
    %710 = vmatpush1.msra.mxu0 0.0
    %711 = vmatprep.subr.mxu0 0.0
    %712 = vmatpush1.msra.mxu0 0.0
    %713 = vmatprep.subr.mxu0 0.0
    %714 = vmatpush1.msra.mxu0 0.0
    %715 = vmatprep.subr.mxu0 0.0
    %716 = vmatpush1.msra.mxu0 0.0
    %717 = vmatprep.subr.mxu0 0.0
    %718 = vmatpush1.msra.mxu0 0.0
    %719 = vmatprep.subr.mxu0 0.0
    %720 = vmatpush1.msra.mxu0 0.0
    %721 = vmatprep.subr.mxu0 0.0
    %722 = vmatpush1.msra.mxu0 0.0
    %723 = vmatprep.subr.mxu0 0.0
    %724 = vmatpush1.msra.mxu0 0.0
    %725 = vmatprep.subr.mxu0 0.0
    %726 = vmatpush1.msra.mxu0 0.0
    %727 = vmatprep.subr.mxu0 0.0
    %728 = vmatpush1.msra.mxu0 0.0
    %729 = vmatprep.subr.mxu0 0.0
    %730 = vmatpush1.msra.mxu0 0.0
    %731 = vmatprep.subr.mxu0 0.0
    %732 = vmatpush1.msra.mxu0 0.0
    %733 = vmatprep.subr.mxu0 0.0
    %734 = vmatpush1.msra.mxu0 0.0
    %735 = vmatprep.subr.mxu0 0.0
    %736 = vmatpush1.msra.mxu0 0.0
    %737 = vmatprep.subr.mxu0 0.0
    %738 = vmatpush1.msra.mxu0 0.0
    %739 = vmatprep.subr.mxu0 0.0
    %740 = vmatpush1.msra.mxu0 0.0
    %741 = vmatprep.subr.mxu0 0.0
    %742 = vmatpush1.msra.mxu0 0.0
    %743 = vmatprep.subr.mxu0 0.0
    %744 = vmatpush1.msra.mxu0 0.0
    %745 = vmatprep.subr.mxu0 0.0
    %746 = vmatpush1.msra.mxu0 0.0
    %747 = vmatprep.subr.mxu0 0.0
    %748 = vmatpush1.msra.mxu0 0.0
    %749 = vmatprep.subr.mxu0 0.0
    %750 = vmatpush1.msra.mxu0 0.0
    %751 = vmatprep.subr.mxu0 0.0
    %752 = vmatpush1.msra.mxu0 0.0
    %753 = vmatprep.subr.mxu0 0.0
    %754 = vmatpush1.msra.mxu0 0.0
    %755 = vmatprep.subr.mxu0 0.0
    %756 = vmatpush1.msra.mxu0 0.0
    %757 = vmatprep.subr.mxu0 0.0
    %758 = vmatpush1.msra.mxu0 0.0
    %759 = vmatprep.subr.mxu0 0.0
    %760 = vmatpush1.msra.mxu0 0.0
    %761 = vmatprep.subr.mxu0 0.0
    %762 = vmatpush1.msra.mxu0 0.0
    %763 = vmatprep.subr.mxu0 0.0
    %764 = vmatpush1.msra.mxu0 0.0
    %765 = vmatprep.mubr.f32.mxu0 0.0
    %766 = vmatmul.mubr.f32.gmra.mrb[0].mxu0 %v134
    %v767 = vpop.f32.mrb[0].mxu0
    %v768 = vadd.f32 0.0, %v767
    %v769 = vpop.f32.mrb[0].mxu0
    %770 = vmatprep.mubr.f32.mxu0 0.0
    %771 = vmatmul.mubr.f32.gmra.mrb[0].mxu0 %v137
    %v772 = vpop.f32.mrb[0].mxu0
    %v773 = vadd.f32 0.0, %v772
    %v774 = vpop.f32.mrb[0].mxu0
    %775 = vmatprep.mubr.f32.mxu0 0.0
    %776 = vmatmul.mubr.f32.gmra.mrb[0].mxu0 %v140
    %v777 = vpop.f32.mrb[0].mxu0
    %v778 = vadd.f32 0.0, %v777
    %v779 = vpop.f32.mrb[0].mxu0
    %780 = vmatprep.mubr.f32.mxu0 0.0
    %781 = vmatmul.mubr.f32.gmra.mrb[0].mxu0 %v143
    %v782 = vpop.f32.mrb[0].mxu0
    %v783 = vadd.f32 0.0, %v782
    %v784 = vpop.f32.mrb[0].mxu0
    %785 = vdwg.mxu0
    %v787 = vsel %vm320, %v598, 0
    %v790 = vsel %vm320, %v603, 0
    %v793 = vsel %vm320, %v678, 0
    %v796 = vsel %vm320, %v683, 0
    %v799 = vsel %vm320, %v688, 0
    %v802 = vsel %vm320, %v693, 0
    %804 = vmatprep.subr.mxu0 0.0
    %805 = vmatpush1.xpose.msra.mxu0 %v793
    %806 = vmatprep.subr.mxu0 0.0
    %807 = vmatpush1.xpose.msra.mxu0 %v796
    %808 = vmatprep.subr.mxu0 0.0
    %809 = vmatpush1.xpose.msra.mxu0 %v799
    %810 = vmatprep.subr.mxu0 0.0
    %811 = vmatpush1.xpose.msra.mxu0 %v802
    %812 = vmatprep.subr.mxu0 0.0
    %813 = vmatpush1.xpose.msra.mxu0 0.0
    %814 = vmatprep.subr.mxu0 0.0
    %815 = vmatpush1.xpose.msra.mxu0 0.0
    %816 = vmatprep.subr.mxu0 0.0
    %817 = vmatpush1.xpose.msra.mxu0 0.0
    %818 = vmatprep.subr.mxu0 0.0
    %819 = vmatpush1.xpose.msra.mxu0 0.0
    %820 = vmatprep.subr.mxu0 0.0
    %821 = vmatpush1.xpose.msra.mxu0 0.0
    %822 = vmatprep.subr.mxu0 0.0
    %823 = vmatpush1.xpose.msra.mxu0 0.0
    %824 = vmatprep.subr.mxu0 0.0
    %825 = vmatpush1.xpose.msra.mxu0 0.0
    %826 = vmatprep.subr.mxu0 0.0
    %827 = vmatpush1.xpose.msra.mxu0 0.0
    %828 = vmatprep.subr.mxu0 0.0
    %829 = vmatpush1.xpose.msra.mxu0 0.0
    %830 = vmatprep.subr.mxu0 0.0
    %831 = vmatpush1.xpose.msra.mxu0 0.0
    %832 = vmatprep.subr.mxu0 0.0
    %833 = vmatpush1.xpose.msra.mxu0 0.0
    %834 = vmatprep.subr.mxu0 0.0
    %835 = vmatpush1.xpose.msra.mxu0 0.0
    %836 = vmatprep.subr.mxu0 0.0
    %837 = vmatpush1.xpose.msra.mxu0 0.0
    %838 = vmatprep.subr.mxu0 0.0
    %839 = vmatpush1.xpose.msra.mxu0 0.0
    %840 = vmatprep.subr.mxu0 0.0
    %841 = vmatpush1.xpose.msra.mxu0 0.0
    %842 = vmatprep.subr.mxu0 0.0
    %843 = vmatpush1.xpose.msra.mxu0 0.0
    %844 = vmatprep.subr.mxu0 0.0
    %845 = vmatpush1.xpose.msra.mxu0 0.0
    %846 = vmatprep.subr.mxu0 0.0
    %847 = vmatpush1.xpose.msra.mxu0 0.0
    %848 = vmatprep.subr.mxu0 0.0
    %849 = vmatpush1.xpose.msra.mxu0 0.0
    %850 = vmatprep.subr.mxu0 0.0
    %851 = vmatpush1.xpose.msra.mxu0 0.0
    %852 = vmatprep.subr.mxu0 0.0
    %853 = vmatpush1.xpose.msra.mxu0 0.0
    %854 = vmatprep.subr.mxu0 0.0
    %855 = vmatpush1.xpose.msra.mxu0 0.0
    %856 = vmatprep.subr.mxu0 0.0
    %857 = vmatpush1.xpose.msra.mxu0 0.0
    %858 = vmatprep.subr.mxu0 0.0
    %859 = vmatpush1.xpose.msra.mxu0 0.0
    %860 = vmatprep.subr.mxu0 0.0
    %861 = vmatpush1.xpose.msra.mxu0 0.0
    %862 = vmatprep.subr.mxu0 0.0
    %863 = vmatpush1.xpose.msra.mxu0 0.0
    %864 = vmatprep.subr.mxu0 0.0
    %865 = vmatpush1.xpose.msra.mxu0 0.0
    %866 = vmatprep.subr.mxu0 0.0
    %867 = vmatpush1.xpose.msra.mxu0 0.0
    %868 = vmatprep.mubr.f32.mxu0 0.0
    %869 = vmatmul.mubr.f32.gmra.mrb[0].mxu0 %v787
    %v870 = vpop.f32.mrb[0].mxu0
    %v871 = vadd.f32 %v33, %v870
    %v872 = vpop.f32.mrb[0].mxu0
    %873 = vmatprep.mubr.f32.mxu0 0.0
    %874 = vmatmul.mubr.f32.gmra.mrb[0].mxu0 %v790
    %v875 = vpop.f32.mrb[0].mxu0
    %v876 = vadd.f32 %v34, %v875
    %v877 = vpop.f32.mrb[0].mxu0
    %878 = vdwg.mxu0
    %v879 = vsel %vm46, %v871, -inf
    %880 = vmax.xlane.f32.xlu0 %v879
    %v881 = vpop.xlane.xlu0 %880
    %v882 = vsel %vm46, %v876, -inf
    %883 = vmax.xlane.f32.xlu0 %v882
    %v884 = vpop.xlane.xlu0 %883
    %v885 = vsub.f32 %v871, %v881
    %v886 = vsub.f32 %v876, %v884
    %v887 = vmul.f32 %v885, 1.442695
    %v888 = vpow.pop %v887
    %v889 = vmul.f32 %v886, 1.442695
    %v890 = vpow.pop %v889
    %v891 = vsel %vm46, %v888, 0.0
    %892 = vadd.xlane.f32.xlu0 %v891
    %v893 = vpop.xlane.xlu0 %892
    %v894 = vsel %vm46, %v890, 0.0
    %895 = vadd.xlane.f32.xlu0 %v894
    %v896 = vpop.xlane.xlu0 %895
    %v897 = vrcp.pop %v893
    %v898 = vrcp.pop %v896
    %v900 = vsel %vm46, %v888, 0
    %v903 = vsel %vm46, %v890, 0
    %905 = vmatprep.subr.mxu0 0.0
    %906 = vmatpush1.msra.mxu0 %v768
    %907 = vmatprep.subr.mxu0 0.0
    %908 = vmatpush1.msra.mxu0 %v773
    %909 = vmatprep.subr.mxu0 0.0
    %910 = vmatpush1.msra.mxu0 %v778
    %911 = vmatprep.subr.mxu0 0.0
    %912 = vmatpush1.msra.mxu0 %v783
    %913 = vmatprep.subr.mxu0 0.0
    %914 = vmatpush1.msra.mxu0 0.0
    %915 = vmatprep.subr.mxu0 0.0
    %916 = vmatpush1.msra.mxu0 0.0
    %917 = vmatprep.subr.mxu0 0.0
    %918 = vmatpush1.msra.mxu0 0.0
    %919 = vmatprep.subr.mxu0 0.0
    %920 = vmatpush1.msra.mxu0 0.0
    %921 = vmatprep.subr.mxu0 0.0
    %922 = vmatpush1.msra.mxu0 0.0
    %923 = vmatprep.subr.mxu0 0.0
    %924 = vmatpush1.msra.mxu0 0.0
    %925 = vmatprep.subr.mxu0 0.0
    %926 = vmatpush1.msra.mxu0 0.0
    %927 = vmatprep.subr.mxu0 0.0
    %928 = vmatpush1.msra.mxu0 0.0
    %929 = vmatprep.subr.mxu0 0.0
    %930 = vmatpush1.msra.mxu0 0.0
    %931 = vmatprep.subr.mxu0 0.0
    %932 = vmatpush1.msra.mxu0 0.0
    %933 = vmatprep.subr.mxu0 0.0
    %934 = vmatpush1.msra.mxu0 0.0
    %935 = vmatprep.subr.mxu0 0.0
    %936 = vmatpush1.msra.mxu0 0.0
    %937 = vmatprep.subr.mxu0 0.0
    %938 = vmatpush1.msra.mxu0 0.0
    %939 = vmatprep.subr.mxu0 0.0
    %940 = vmatpush1.msra.mxu0 0.0
    %941 = vmatprep.subr.mxu0 0.0
    %942 = vmatpush1.msra.mxu0 0.0
    %943 = vmatprep.subr.mxu0 0.0
    %944 = vmatpush1.msra.mxu0 0.0
    %945 = vmatprep.subr.mxu0 0.0
    %946 = vmatpush1.msra.mxu0 0.0
    %947 = vmatprep.subr.mxu0 0.0
    %948 = vmatpush1.msra.mxu0 0.0
    %949 = vmatprep.subr.mxu0 0.0
    %950 = vmatpush1.msra.mxu0 0.0
    %951 = vmatprep.subr.mxu0 0.0
    %952 = vmatpush1.msra.mxu0 0.0
    %953 = vmatprep.subr.mxu0 0.0
    %954 = vmatpush1.msra.mxu0 0.0
    %955 = vmatprep.subr.mxu0 0.0
    %956 = vmatpush1.msra.mxu0 0.0
    %957 = vmatprep.subr.mxu0 0.0
    %958 = vmatpush1.msra.mxu0 0.0
    %959 = vmatprep.subr.mxu0 0.0
    %960 = vmatpush1.msra.mxu0 0.0
    %961 = vmatprep.subr.mxu0 0.0
    %962 = vmatpush1.msra.mxu0 0.0
    %963 = vmatprep.subr.mxu0 0.0
    %964 = vmatpush1.msra.mxu0 0.0
    %965 = vmatprep.subr.mxu0 0.0
    %966 = vmatpush1.msra.mxu0 0.0
    %967 = vmatprep.subr.mxu0 0.0
    %968 = vmatpush1.msra.mxu0 0.0
    %969 = vmatprep.mubr.f32.mxu0 0.0
    %970 = vmatmul.mubr.f32.gmra.mrb[0].mxu0 %v900
    %v971 = vpop.f32.mrb[0].mxu0
    %v972 = vadd.f32 0.0, %v971
    %v973 = vpop.f32.mrb[0].mxu0
    %974 = vmatprep.mubr.f32.mxu0 0.0
    %975 = vmatmul.mubr.f32.gmra.mrb[0].mxu0 %v903
    %v976 = vpop.f32.mrb[0].mxu0
    %v977 = vadd.f32 0.0, %v976
    %v978 = vpop.f32.mrb[0].mxu0
    %979 = vdwg.mxu0
    %v980 = vmul.f32 %v972, %v897
    %v981 = vmul.f32 %v977, %v898
    %s982 = scalar_lea.vmem %s5, 8
    %v983 = vld [vmem:[%s982] sm:$0xff]
    %v985 = vsel %vm320, %v980, 0
    %v988 = vsel %vm320, %v981, 0
    %990 = vmatprep.subr.mxu0 0.0
    %991 = vmatpush1.msra.mxu0 %v983
    %992 = vmatprep.subr.mxu0 0.0
    %993 = vmatpush1.msra.mxu0 0.0
    %994 = vmatprep.subr.mxu0 0.0
    %995 = vmatpush1.msra.mxu0 0.0
    %996 = vmatprep.subr.mxu0 0.0
    %997 = vmatpush1.msra.mxu0 0.0
    %998 = vmatprep.subr.mxu0 0.0
    %999 = vmatpush1.msra.mxu0 0.0
    %1000 = vmatprep.subr.mxu0 0.0
    %1001 = vmatpush1.msra.mxu0 0.0
    %1002 = vmatprep.subr.mxu0 0.0
    %1003 = vmatpush1.msra.mxu0 0.0
    %1004 = vmatprep.subr.mxu0 0.0
    %1005 = vmatpush1.msra.mxu0 0.0
    %1006 = vmatprep.subr.mxu0 0.0
    %1007 = vmatpush1.msra.mxu0 0.0
    %1008 = vmatprep.subr.mxu0 0.0
    %1009 = vmatpush1.msra.mxu0 0.0
    %1010 = vmatprep.subr.mxu0 0.0
    %1011 = vmatpush1.msra.mxu0 0.0
    %1012 = vmatprep.subr.mxu0 0.0
    %1013 = vmatpush1.msra.mxu0 0.0
    %1014 = vmatprep.subr.mxu0 0.0
    %1015 = vmatpush1.msra.mxu0 0.0
    %1016 = vmatprep.subr.mxu0 0.0
    %1017 = vmatpush1.msra.mxu0 0.0
    %1018 = vmatprep.subr.mxu0 0.0
    %1019 = vmatpush1.msra.mxu0 0.0
    %1020 = vmatprep.subr.mxu0 0.0
    %1021 = vmatpush1.msra.mxu0 0.0
    %1022 = vmatprep.subr.mxu0 0.0
    %1023 = vmatpush1.msra.mxu0 0.0
    %1024 = vmatprep.subr.mxu0 0.0
    %1025 = vmatpush1.msra.mxu0 0.0
    %1026 = vmatprep.subr.mxu0 0.0
    %1027 = vmatpush1.msra.mxu0 0.0
    %1028 = vmatprep.subr.mxu0 0.0
    %1029 = vmatpush1.msra.mxu0 0.0
    %1030 = vmatprep.subr.mxu0 0.0
    %1031 = vmatpush1.msra.mxu0 0.0
    %1032 = vmatprep.subr.mxu0 0.0
    %1033 = vmatpush1.msra.mxu0 0.0
    %1034 = vmatprep.subr.mxu0 0.0
    %1035 = vmatpush1.msra.mxu0 0.0
    %1036 = vmatprep.subr.mxu0 0.0
    %1037 = vmatpush1.msra.mxu0 0.0
    %1038 = vmatprep.subr.mxu0 0.0
    %1039 = vmatpush1.msra.mxu0 0.0
    %1040 = vmatprep.subr.mxu0 0.0
    %1041 = vmatpush1.msra.mxu0 0.0
    %1042 = vmatprep.subr.mxu0 0.0
    %1043 = vmatpush1.msra.mxu0 0.0
    %1044 = vmatprep.subr.mxu0 0.0
    %1045 = vmatpush1.msra.mxu0 0.0
    %1046 = vmatprep.subr.mxu0 0.0
    %1047 = vmatpush1.msra.mxu0 0.0
    %1048 = vmatprep.subr.mxu0 0.0
    %1049 = vmatpush1.msra.mxu0 0.0
    %1050 = vmatprep.subr.mxu0 0.0
    %1051 = vmatpush1.msra.mxu0 0.0
    %1052 = vmatprep.subr.mxu0 0.0
    %1053 = vmatpush1.msra.mxu0 0.0
    %1054 = vmatprep.mubr.f32.mxu0 0.0
    %1055 = vmatmul.mubr.f32.gmra.mrb[0].mxu0 %v985
    %v1056 = vpop.f32.mrb[0].mxu0
    %v1057 = vadd.f32 0.0, %v1056
    %v1058 = vpop.f32.mrb[0].mxu0
    %1059 = vmatprep.mubr.f32.mxu0 0.0
    %1060 = vmatmul.mubr.f32.gmra.mrb[0].mxu0 %v988
    %v1061 = vpop.f32.mrb[0].mxu0
    %v1062 = vadd.f32 0.0, %v1061
    %v1063 = vpop.f32.mrb[0].mxu0
    %1064 = vdwg.mxu0
    %v1066 = vsel %vm320, %v515, 0
    %v1069 = vsel %vm320, %v516, 0
    %1071 = vmatprep.subr.mxu0 0.0
    %1072 = vmatpush1.msra.mxu0 %v517
    %1073 = vmatprep.subr.mxu0 0.0
    %1074 = vmatpush1.msra.mxu0 0.0
    %1075 = vmatprep.subr.mxu0 0.0
    %1076 = vmatpush1.msra.mxu0 0.0
    %1077 = vmatprep.subr.mxu0 0.0
    %1078 = vmatpush1.msra.mxu0 0.0
    %1079 = vmatprep.subr.mxu0 0.0
    %1080 = vmatpush1.msra.mxu0 0.0
    %1081 = vmatprep.subr.mxu0 0.0
    %1082 = vmatpush1.msra.mxu0 0.0
    %1083 = vmatprep.subr.mxu0 0.0
    %1084 = vmatpush1.msra.mxu0 0.0
    %1085 = vmatprep.subr.mxu0 0.0
    %1086 = vmatpush1.msra.mxu0 0.0
    %1087 = vmatprep.subr.mxu0 0.0
    %1088 = vmatpush1.msra.mxu0 0.0
    %1089 = vmatprep.subr.mxu0 0.0
    %1090 = vmatpush1.msra.mxu0 0.0
    %1091 = vmatprep.subr.mxu0 0.0
    %1092 = vmatpush1.msra.mxu0 0.0
    %1093 = vmatprep.subr.mxu0 0.0
    %1094 = vmatpush1.msra.mxu0 0.0
    %1095 = vmatprep.subr.mxu0 0.0
    %1096 = vmatpush1.msra.mxu0 0.0
    %1097 = vmatprep.subr.mxu0 0.0
    %1098 = vmatpush1.msra.mxu0 0.0
    %1099 = vmatprep.subr.mxu0 0.0
    %1100 = vmatpush1.msra.mxu0 0.0
    %1101 = vmatprep.subr.mxu0 0.0
    %1102 = vmatpush1.msra.mxu0 0.0
    %1103 = vmatprep.subr.mxu0 0.0
    %1104 = vmatpush1.msra.mxu0 0.0
    %1105 = vmatprep.subr.mxu0 0.0
    %1106 = vmatpush1.msra.mxu0 0.0
    %1107 = vmatprep.subr.mxu0 0.0
    %1108 = vmatpush1.msra.mxu0 0.0
    %1109 = vmatprep.subr.mxu0 0.0
    %1110 = vmatpush1.msra.mxu0 0.0
    %1111 = vmatprep.subr.mxu0 0.0
    %1112 = vmatpush1.msra.mxu0 0.0
    %1113 = vmatprep.subr.mxu0 0.0
    %1114 = vmatpush1.msra.mxu0 0.0
    %1115 = vmatprep.subr.mxu0 0.0
    %1116 = vmatpush1.msra.mxu0 0.0
    %1117 = vmatprep.subr.mxu0 0.0
    %1118 = vmatpush1.msra.mxu0 0.0
    %1119 = vmatprep.subr.mxu0 0.0
    %1120 = vmatpush1.msra.mxu0 0.0
    %1121 = vmatprep.subr.mxu0 0.0
    %1122 = vmatpush1.msra.mxu0 0.0
    %1123 = vmatprep.subr.mxu0 0.0
    %1124 = vmatpush1.msra.mxu0 0.0
    %1125 = vmatprep.subr.mxu0 0.0
    %1126 = vmatpush1.msra.mxu0 0.0
    %1127 = vmatprep.subr.mxu0 0.0
    %1128 = vmatpush1.msra.mxu0 0.0
    %1129 = vmatprep.subr.mxu0 0.0
    %1130 = vmatpush1.msra.mxu0 0.0
    %1131 = vmatprep.subr.mxu0 0.0
    %1132 = vmatpush1.msra.mxu0 0.0
    %1133 = vmatprep.subr.mxu0 0.0
    %1134 = vmatpush1.msra.mxu0 0.0
    %1135 = vmatprep.mubr.f32.mxu0 0.0
    %1136 = vmatmul.mubr.f32.gmra.mrb[0].mxu0 %v1066
    %v1137 = vpop.f32.mrb[0].mxu0
    %v1138 = vadd.f32 %v1057, %v1137
    %v1139 = vpop.f32.mrb[0].mxu0
    %1140 = vmatprep.mubr.f32.mxu0 0.0
    %1141 = vmatmul.mubr.f32.gmra.mrb[0].mxu0 %v1069
    %v1142 = vpop.f32.mrb[0].mxu0
    %v1143 = vadd.f32 %v1062, %v1142
    %v1144 = vpop.f32.mrb[0].mxu0
    %1145 = vdwg.mxu0
    %s1146 = scalar_lea.vmem %s3, 64
    %v1147 = vld [vmem:[%s1146] sm:$0xff]
    %v1148 = vld [vmem:[%s1146 + $0x8] sm:$0xff]
    %v1149 = vld [vmem:[%s1146 + $0x10] sm:$0xff]
    %v1150 = vld [vmem:[%s1146 + $0x18] sm:$0xff]
    %s1151 = scalar_lea.vmem %s4, 2
    %v1152 = vld [vmem:[%s1151] sm:$0x1]
    %v1154 = vlaneseq
    %v1155 = vshrl.u32 %v1154, 7
    %v1156 = vsub.s32 0, %v1155
    %v1157 = vrot.slane %v1152, %v1156
    %1159 = vmatprep.subr.mxu0 0.0
    %1160 = vmatpush1.msra.mxu0 %v1147
    %1161 = vmatprep.subr.mxu0 0.0
    %1162 = vmatpush1.msra.mxu0 %v1148
    %1163 = vmatprep.subr.mxu0 0.0
    %1164 = vmatpush1.msra.mxu0 %v1149
    %1165 = vmatprep.subr.mxu0 0.0
    %1166 = vmatpush1.msra.mxu0 %v1150
    %1167 = vmatprep.subr.mxu0 0.0
    %1168 = vmatpush1.msra.mxu0 0.0
    %1169 = vmatprep.subr.mxu0 0.0
    %1170 = vmatpush1.msra.mxu0 0.0
    %1171 = vmatprep.subr.mxu0 0.0
    %1172 = vmatpush1.msra.mxu0 0.0
    %1173 = vmatprep.subr.mxu0 0.0
    %1174 = vmatpush1.msra.mxu0 0.0
    %1175 = vmatprep.subr.mxu0 0.0
    %1176 = vmatpush1.msra.mxu0 0.0
    %1177 = vmatprep.subr.mxu0 0.0
    %1178 = vmatpush1.msra.mxu0 0.0
    %1179 = vmatprep.subr.mxu0 0.0
    %1180 = vmatpush1.msra.mxu0 0.0
    %1181 = vmatprep.subr.mxu0 0.0
    %1182 = vmatpush1.msra.mxu0 0.0
    %1183 = vmatprep.subr.mxu0 0.0
    %1184 = vmatpush1.msra.mxu0 0.0
    %1185 = vmatprep.subr.mxu0 0.0
    %1186 = vmatpush1.msra.mxu0 0.0
    %1187 = vmatprep.subr.mxu0 0.0
    %1188 = vmatpush1.msra.mxu0 0.0
    %1189 = vmatprep.subr.mxu0 0.0
    %1190 = vmatpush1.msra.mxu0 0.0
    %1191 = vmatprep.subr.mxu0 0.0
    %1192 = vmatpush1.msra.mxu0 0.0
    %1193 = vmatprep.subr.mxu0 0.0
    %1194 = vmatpush1.msra.mxu0 0.0
    %1195 = vmatprep.subr.mxu0 0.0
    %1196 = vmatpush1.msra.mxu0 0.0
    %1197 = vmatprep.subr.mxu0 0.0
    %1198 = vmatpush1.msra.mxu0 0.0
    %1199 = vmatprep.subr.mxu0 0.0
    %1200 = vmatpush1.msra.mxu0 0.0
    %1201 = vmatprep.subr.mxu0 0.0
    %1202 = vmatpush1.msra.mxu0 0.0
    %1203 = vmatprep.subr.mxu0 0.0
    %1204 = vmatpush1.msra.mxu0 0.0
    %1205 = vmatprep.subr.mxu0 0.0
    %1206 = vmatpush1.msra.mxu0 0.0
    %1207 = vmatprep.subr.mxu0 0.0
    %1208 = vmatpush1.msra.mxu0 0.0
    %1209 = vmatprep.subr.mxu0 0.0
    %1210 = vmatpush1.msra.mxu0 0.0
    %1211 = vmatprep.subr.mxu0 0.0
    %1212 = vmatpush1.msra.mxu0 0.0
    %1213 = vmatprep.subr.mxu0 0.0
    %1214 = vmatpush1.msra.mxu0 0.0
    %1215 = vmatprep.subr.mxu0 0.0
    %1216 = vmatpush1.msra.mxu0 0.0
    %1217 = vmatprep.subr.mxu0 0.0
    %1218 = vmatpush1.msra.mxu0 0.0
    %1219 = vmatprep.subr.mxu0 0.0
    %1220 = vmatpush1.msra.mxu0 0.0
    %1221 = vmatprep.subr.mxu0 0.0
    %1222 = vmatpush1.msra.mxu0 0.0
    %1223 = vmatprep.mubr.f32.mxu0 0.0
    %1224 = vmatmul.mubr.f32.gmra.mrb[0].mxu0 %v48
    %v1225 = vpop.f32.mrb[0].mxu0
    %v1226 = vadd.f32 %v1157, %v1225
    %v1227 = vpop.f32.mrb[0].mxu0
    %1228 = vmatprep.mubr.f32.mxu0 0.0
    %1229 = vmatmul.mubr.f32.gmra.mrb[0].mxu0 %v51
    %v1230 = vpop.f32.mrb[0].mxu0
    %v1231 = vadd.f32 %v1157, %v1230
    %v1232 = vpop.f32.mrb[0].mxu0
    %1233 = vdwg.mxu0
    %s1234 = scalar_lea.vmem %s3, 192
    %v1235 = vld [vmem:[%s1234] sm:$0xff]
    %v1236 = vld [vmem:[%s1234 + $0x8] sm:$0xff]
    %v1237 = vld [vmem:[%s1234 + $0x10] sm:$0xff]
    %v1238 = vld [vmem:[%s1234 + $0x18] sm:$0xff]
    %1239 = vmatprep.subr.mxu0 0.0
    %1240 = vmatpush1.msra.mxu0 %v1235
    %1241 = vmatprep.subr.mxu0 0.0
    %1242 = vmatpush1.msra.mxu0 %v1236
    %1243 = vmatprep.subr.mxu0 0.0
    %1244 = vmatpush1.msra.mxu0 %v1237
    %1245 = vmatprep.subr.mxu0 0.0
    %1246 = vmatpush1.msra.mxu0 %v1238
    %1247 = vmatprep.subr.mxu0 0.0
    %1248 = vmatpush1.msra.mxu0 0.0
    %1249 = vmatprep.subr.mxu0 0.0
    %1250 = vmatpush1.msra.mxu0 0.0
    %1251 = vmatprep.subr.mxu0 0.0
    %1252 = vmatpush1.msra.mxu0 0.0
    %1253 = vmatprep.subr.mxu0 0.0
    %1254 = vmatpush1.msra.mxu0 0.0
    %1255 = vmatprep.subr.mxu0 0.0
    %1256 = vmatpush1.msra.mxu0 0.0
    %1257 = vmatprep.subr.mxu0 0.0
    %1258 = vmatpush1.msra.mxu0 0.0
    %1259 = vmatprep.subr.mxu0 0.0
    %1260 = vmatpush1.msra.mxu0 0.0
    %1261 = vmatprep.subr.mxu0 0.0
    %1262 = vmatpush1.msra.mxu0 0.0
    %1263 = vmatprep.subr.mxu0 0.0
    %1264 = vmatpush1.msra.mxu0 0.0
    %1265 = vmatprep.subr.mxu0 0.0
    %1266 = vmatpush1.msra.mxu0 0.0
    %1267 = vmatprep.subr.mxu0 0.0
    %1268 = vmatpush1.msra.mxu0 0.0
    %1269 = vmatprep.subr.mxu0 0.0
    %1270 = vmatpush1.msra.mxu0 0.0
    %1271 = vmatprep.subr.mxu0 0.0
    %1272 = vmatpush1.msra.mxu0 0.0
    %1273 = vmatprep.subr.mxu0 0.0
    %1274 = vmatpush1.msra.mxu0 0.0
    %1275 = vmatprep.subr.mxu0 0.0
    %1276 = vmatpush1.msra.mxu0 0.0
    %1277 = vmatprep.subr.mxu0 0.0
    %1278 = vmatpush1.msra.mxu0 0.0
    %1279 = vmatprep.subr.mxu0 0.0
    %1280 = vmatpush1.msra.mxu0 0.0
    %1281 = vmatprep.subr.mxu0 0.0
    %1282 = vmatpush1.msra.mxu0 0.0
    %1283 = vmatprep.subr.mxu0 0.0
    %1284 = vmatpush1.msra.mxu0 0.0
    %1285 = vmatprep.subr.mxu0 0.0
    %1286 = vmatpush1.msra.mxu0 0.0
    %1287 = vmatprep.subr.mxu0 0.0
    %1288 = vmatpush1.msra.mxu0 0.0
    %1289 = vmatprep.subr.mxu0 0.0
    %1290 = vmatpush1.msra.mxu0 0.0
    %1291 = vmatprep.subr.mxu0 0.0
    %1292 = vmatpush1.msra.mxu0 0.0
    %1293 = vmatprep.subr.mxu0 0.0
    %1294 = vmatpush1.msra.mxu0 0.0
    %1295 = vmatprep.subr.mxu0 0.0
    %1296 = vmatpush1.msra.mxu0 0.0
    %1297 = vmatprep.subr.mxu0 0.0
    %1298 = vmatpush1.msra.mxu0 0.0
    %1299 = vmatprep.subr.mxu0 0.0
    %1300 = vmatpush1.msra.mxu0 0.0
    %1301 = vmatprep.subr.mxu0 0.0
    %1302 = vmatpush1.msra.mxu0 0.0
    %1303 = vmatprep.mubr.f32.mxu0 0.0
    %1304 = vmatmul.mubr.f32.gmra.mrb[0].mxu0 %v134
    %v1305 = vpop.f32.mrb[0].mxu0
    %v1306 = vadd.f32 0.0, %v1305
    %v1307 = vpop.f32.mrb[0].mxu0
    %1308 = vmatprep.mubr.f32.mxu0 0.0
    %1309 = vmatmul.mubr.f32.gmra.mrb[0].mxu0 %v137
    %v1310 = vpop.f32.mrb[0].mxu0
    %v1311 = vadd.f32 0.0, %v1310
    %v1312 = vpop.f32.mrb[0].mxu0
    %1313 = vmatprep.mubr.f32.mxu0 0.0
    %1314 = vmatmul.mubr.f32.gmra.mrb[0].mxu0 %v140
    %v1315 = vpop.f32.mrb[0].mxu0
    %v1316 = vadd.f32 0.0, %v1315
    %v1317 = vpop.f32.mrb[0].mxu0
    %1318 = vmatprep.mubr.f32.mxu0 0.0
    %1319 = vmatmul.mubr.f32.gmra.mrb[0].mxu0 %v143
    %v1320 = vpop.f32.mrb[0].mxu0
    %v1321 = vadd.f32 0.0, %v1320
    %v1322 = vpop.f32.mrb[0].mxu0
    %1323 = vdwg.mxu0
    %s1324 = scalar_lea.vmem %s3, 320
    %v1325 = vld [vmem:[%s1324] sm:$0xff]
    %v1326 = vld [vmem:[%s1324 + $0x8] sm:$0xff]
    %v1327 = vld [vmem:[%s1324 + $0x10] sm:$0xff]
    %v1328 = vld [vmem:[%s1324 + $0x18] sm:$0xff]
    %1329 = vmatprep.subr.mxu0 0.0
    %1330 = vmatpush1.msra.mxu0 %v1325
    %1331 = vmatprep.subr.mxu0 0.0
    %1332 = vmatpush1.msra.mxu0 %v1326
    %1333 = vmatprep.subr.mxu0 0.0
    %1334 = vmatpush1.msra.mxu0 %v1327
    %1335 = vmatprep.subr.mxu0 0.0
    %1336 = vmatpush1.msra.mxu0 %v1328
    %1337 = vmatprep.subr.mxu0 0.0
    %1338 = vmatpush1.msra.mxu0 0.0
    %1339 = vmatprep.subr.mxu0 0.0
    %1340 = vmatpush1.msra.mxu0 0.0
    %1341 = vmatprep.subr.mxu0 0.0
    %1342 = vmatpush1.msra.mxu0 0.0
    %1343 = vmatprep.subr.mxu0 0.0
    %1344 = vmatpush1.msra.mxu0 0.0
    %1345 = vmatprep.subr.mxu0 0.0
    %1346 = vmatpush1.msra.mxu0 0.0
    %1347 = vmatprep.subr.mxu0 0.0
    %1348 = vmatpush1.msra.mxu0 0.0
    %1349 = vmatprep.subr.mxu0 0.0
    %1350 = vmatpush1.msra.mxu0 0.0
    %1351 = vmatprep.subr.mxu0 0.0
    %1352 = vmatpush1.msra.mxu0 0.0
    %1353 = vmatprep.subr.mxu0 0.0
    %1354 = vmatpush1.msra.mxu0 0.0
    %1355 = vmatprep.subr.mxu0 0.0
    %1356 = vmatpush1.msra.mxu0 0.0
    %1357 = vmatprep.subr.mxu0 0.0
    %1358 = vmatpush1.msra.mxu0 0.0
    %1359 = vmatprep.subr.mxu0 0.0
    %1360 = vmatpush1.msra.mxu0 0.0
    %1361 = vmatprep.subr.mxu0 0.0
    %1362 = vmatpush1.msra.mxu0 0.0
    %1363 = vmatprep.subr.mxu0 0.0
    %1364 = vmatpush1.msra.mxu0 0.0
    %1365 = vmatprep.subr.mxu0 0.0
    %1366 = vmatpush1.msra.mxu0 0.0
    %1367 = vmatprep.subr.mxu0 0.0
    %1368 = vmatpush1.msra.mxu0 0.0
    %1369 = vmatprep.subr.mxu0 0.0
    %1370 = vmatpush1.msra.mxu0 0.0
    %1371 = vmatprep.subr.mxu0 0.0
    %1372 = vmatpush1.msra.mxu0 0.0
    %1373 = vmatprep.subr.mxu0 0.0
    %1374 = vmatpush1.msra.mxu0 0.0
    %1375 = vmatprep.subr.mxu0 0.0
    %1376 = vmatpush1.msra.mxu0 0.0
    %1377 = vmatprep.subr.mxu0 0.0
    %1378 = vmatpush1.msra.mxu0 0.0
    %1379 = vmatprep.subr.mxu0 0.0
    %1380 = vmatpush1.msra.mxu0 0.0
    %1381 = vmatprep.subr.mxu0 0.0
    %1382 = vmatpush1.msra.mxu0 0.0
    %1383 = vmatprep.subr.mxu0 0.0
    %1384 = vmatpush1.msra.mxu0 0.0
    %1385 = vmatprep.subr.mxu0 0.0
    %1386 = vmatpush1.msra.mxu0 0.0
    %1387 = vmatprep.subr.mxu0 0.0
    %1388 = vmatpush1.msra.mxu0 0.0
    %1389 = vmatprep.subr.mxu0 0.0
    %1390 = vmatpush1.msra.mxu0 0.0
    %1391 = vmatprep.subr.mxu0 0.0
    %1392 = vmatpush1.msra.mxu0 0.0
    %1393 = vmatprep.mubr.f32.mxu0 0.0
    %1394 = vmatmul.mubr.f32.gmra.mrb[0].mxu0 %v134
    %v1395 = vpop.f32.mrb[0].mxu0
    %v1396 = vadd.f32 0.0, %v1395
    %v1397 = vpop.f32.mrb[0].mxu0
    %1398 = vmatprep.mubr.f32.mxu0 0.0
    %1399 = vmatmul.mubr.f32.gmra.mrb[0].mxu0 %v137
    %v1400 = vpop.f32.mrb[0].mxu0
    %v1401 = vadd.f32 0.0, %v1400
    %v1402 = vpop.f32.mrb[0].mxu0
    %1403 = vmatprep.mubr.f32.mxu0 0.0
    %1404 = vmatmul.mubr.f32.gmra.mrb[0].mxu0 %v140
    %v1405 = vpop.f32.mrb[0].mxu0
    %v1406 = vadd.f32 0.0, %v1405
    %v1407 = vpop.f32.mrb[0].mxu0
    %1408 = vmatprep.mubr.f32.mxu0 0.0
    %1409 = vmatmul.mubr.f32.gmra.mrb[0].mxu0 %v143
    %v1410 = vpop.f32.mrb[0].mxu0
    %v1411 = vadd.f32 0.0, %v1410
    %v1412 = vpop.f32.mrb[0].mxu0
    %1413 = vdwg.mxu0
    %v1415 = vsel %vm320, %v1226, 0
    %v1418 = vsel %vm320, %v1231, 0
    %v1421 = vsel %vm320, %v1306, 0
    %v1424 = vsel %vm320, %v1311, 0
    %v1427 = vsel %vm320, %v1316, 0
    %v1430 = vsel %vm320, %v1321, 0
    %1432 = vmatprep.subr.mxu0 0.0
    %1433 = vmatpush1.xpose.msra.mxu0 %v1421
    %1434 = vmatprep.subr.mxu0 0.0
    %1435 = vmatpush1.xpose.msra.mxu0 %v1424
    %1436 = vmatprep.subr.mxu0 0.0
    %1437 = vmatpush1.xpose.msra.mxu0 %v1427
    %1438 = vmatprep.subr.mxu0 0.0
    %1439 = vmatpush1.xpose.msra.mxu0 %v1430
    %1440 = vmatprep.subr.mxu0 0.0
    %1441 = vmatpush1.xpose.msra.mxu0 0.0
    %1442 = vmatprep.subr.mxu0 0.0
    %1443 = vmatpush1.xpose.msra.mxu0 0.0
    %1444 = vmatprep.subr.mxu0 0.0
    %1445 = vmatpush1.xpose.msra.mxu0 0.0
    %1446 = vmatprep.subr.mxu0 0.0
    %1447 = vmatpush1.xpose.msra.mxu0 0.0
    %1448 = vmatprep.subr.mxu0 0.0
    %1449 = vmatpush1.xpose.msra.mxu0 0.0
    %1450 = vmatprep.subr.mxu0 0.0
    %1451 = vmatpush1.xpose.msra.mxu0 0.0
    %1452 = vmatprep.subr.mxu0 0.0
    %1453 = vmatpush1.xpose.msra.mxu0 0.0
    %1454 = vmatprep.subr.mxu0 0.0
    %1455 = vmatpush1.xpose.msra.mxu0 0.0
    %1456 = vmatprep.subr.mxu0 0.0
    %1457 = vmatpush1.xpose.msra.mxu0 0.0
    %1458 = vmatprep.subr.mxu0 0.0
    %1459 = vmatpush1.xpose.msra.mxu0 0.0
    %1460 = vmatprep.subr.mxu0 0.0
    %1461 = vmatpush1.xpose.msra.mxu0 0.0
    %1462 = vmatprep.subr.mxu0 0.0
    %1463 = vmatpush1.xpose.msra.mxu0 0.0
    %1464 = vmatprep.subr.mxu0 0.0
    %1465 = vmatpush1.xpose.msra.mxu0 0.0
    %1466 = vmatprep.subr.mxu0 0.0
    %1467 = vmatpush1.xpose.msra.mxu0 0.0
    %1468 = vmatprep.subr.mxu0 0.0
    %1469 = vmatpush1.xpose.msra.mxu0 0.0
    %1470 = vmatprep.subr.mxu0 0.0
    %1471 = vmatpush1.xpose.msra.mxu0 0.0
    %1472 = vmatprep.subr.mxu0 0.0
    %1473 = vmatpush1.xpose.msra.mxu0 0.0
    %1474 = vmatprep.subr.mxu0 0.0
    %1475 = vmatpush1.xpose.msra.mxu0 0.0
    %1476 = vmatprep.subr.mxu0 0.0
    %1477 = vmatpush1.xpose.msra.mxu0 0.0
    %1478 = vmatprep.subr.mxu0 0.0
    %1479 = vmatpush1.xpose.msra.mxu0 0.0
    %1480 = vmatprep.subr.mxu0 0.0
    %1481 = vmatpush1.xpose.msra.mxu0 0.0
    %1482 = vmatprep.subr.mxu0 0.0
    %1483 = vmatpush1.xpose.msra.mxu0 0.0
    %1484 = vmatprep.subr.mxu0 0.0
    %1485 = vmatpush1.xpose.msra.mxu0 0.0
    %1486 = vmatprep.subr.mxu0 0.0
    %1487 = vmatpush1.xpose.msra.mxu0 0.0
    %1488 = vmatprep.subr.mxu0 0.0
    %1489 = vmatpush1.xpose.msra.mxu0 0.0
    %1490 = vmatprep.subr.mxu0 0.0
    %1491 = vmatpush1.xpose.msra.mxu0 0.0
    %1492 = vmatprep.subr.mxu0 0.0
    %1493 = vmatpush1.xpose.msra.mxu0 0.0
    %1494 = vmatprep.subr.mxu0 0.0
    %1495 = vmatpush1.xpose.msra.mxu0 0.0
    %1496 = vmatprep.mubr.f32.mxu0 0.0
    %1497 = vmatmul.mubr.f32.gmra.mrb[0].mxu0 %v1415
    %v1498 = vpop.f32.mrb[0].mxu0
    %v1499 = vadd.f32 %v33, %v1498
    %v1500 = vpop.f32.mrb[0].mxu0
    %1501 = vmatprep.mubr.f32.mxu0 0.0
    %1502 = vmatmul.mubr.f32.gmra.mrb[0].mxu0 %v1418
    %v1503 = vpop.f32.mrb[0].mxu0
    %v1504 = vadd.f32 %v34, %v1503
    %v1505 = vpop.f32.mrb[0].mxu0
    %1506 = vdwg.mxu0
    %v1507 = vsel %vm46, %v1499, -inf
    %1508 = vmax.xlane.f32.xlu0 %v1507
    %v1509 = vpop.xlane.xlu0 %1508
    %v1510 = vsel %vm46, %v1504, -inf
    %1511 = vmax.xlane.f32.xlu0 %v1510
    %v1512 = vpop.xlane.xlu0 %1511
    %v1513 = vsub.f32 %v1499, %v1509
    %v1514 = vsub.f32 %v1504, %v1512
    %v1515 = vmul.f32 %v1513, 1.442695
    %v1516 = vpow.pop %v1515
    %v1517 = vmul.f32 %v1514, 1.442695
    %v1518 = vpow.pop %v1517
    %v1519 = vsel %vm46, %v1516, 0.0
    %1520 = vadd.xlane.f32.xlu0 %v1519
    %v1521 = vpop.xlane.xlu0 %1520
    %v1522 = vsel %vm46, %v1518, 0.0
    %1523 = vadd.xlane.f32.xlu0 %v1522
    %v1524 = vpop.xlane.xlu0 %1523
    %v1525 = vrcp.pop %v1521
    %v1526 = vrcp.pop %v1524
    %v1528 = vsel %vm46, %v1516, 0
    %v1531 = vsel %vm46, %v1518, 0
    %1533 = vmatprep.subr.mxu0 0.0
    %1534 = vmatpush1.msra.mxu0 %v1396
    %1535 = vmatprep.subr.mxu0 0.0
    %1536 = vmatpush1.msra.mxu0 %v1401
    %1537 = vmatprep.subr.mxu0 0.0
    %1538 = vmatpush1.msra.mxu0 %v1406
    %1539 = vmatprep.subr.mxu0 0.0
    %1540 = vmatpush1.msra.mxu0 %v1411
    %1541 = vmatprep.subr.mxu0 0.0
    %1542 = vmatpush1.msra.mxu0 0.0
    %1543 = vmatprep.subr.mxu0 0.0
    %1544 = vmatpush1.msra.mxu0 0.0
    %1545 = vmatprep.subr.mxu0 0.0
    %1546 = vmatpush1.msra.mxu0 0.0
    %1547 = vmatprep.subr.mxu0 0.0
    %1548 = vmatpush1.msra.mxu0 0.0
    %1549 = vmatprep.subr.mxu0 0.0
    %1550 = vmatpush1.msra.mxu0 0.0
    %1551 = vmatprep.subr.mxu0 0.0
    %1552 = vmatpush1.msra.mxu0 0.0
    %1553 = vmatprep.subr.mxu0 0.0
    %1554 = vmatpush1.msra.mxu0 0.0
    %1555 = vmatprep.subr.mxu0 0.0
    %1556 = vmatpush1.msra.mxu0 0.0
    %1557 = vmatprep.subr.mxu0 0.0
    %1558 = vmatpush1.msra.mxu0 0.0
    %1559 = vmatprep.subr.mxu0 0.0
    %1560 = vmatpush1.msra.mxu0 0.0
    %1561 = vmatprep.subr.mxu0 0.0
    %1562 = vmatpush1.msra.mxu0 0.0
    %1563 = vmatprep.subr.mxu0 0.0
    %1564 = vmatpush1.msra.mxu0 0.0
    %1565 = vmatprep.subr.mxu0 0.0
    %1566 = vmatpush1.msra.mxu0 0.0
    %1567 = vmatprep.subr.mxu0 0.0
    %1568 = vmatpush1.msra.mxu0 0.0
    %1569 = vmatprep.subr.mxu0 0.0
    %1570 = vmatpush1.msra.mxu0 0.0
    %1571 = vmatprep.subr.mxu0 0.0
    %1572 = vmatpush1.msra.mxu0 0.0
    %1573 = vmatprep.subr.mxu0 0.0
    %1574 = vmatpush1.msra.mxu0 0.0
    %1575 = vmatprep.subr.mxu0 0.0
    %1576 = vmatpush1.msra.mxu0 0.0
    %1577 = vmatprep.subr.mxu0 0.0
    %1578 = vmatpush1.msra.mxu0 0.0
    %1579 = vmatprep.subr.mxu0 0.0
    %1580 = vmatpush1.msra.mxu0 0.0
    %1581 = vmatprep.subr.mxu0 0.0
    %1582 = vmatpush1.msra.mxu0 0.0
    %1583 = vmatprep.subr.mxu0 0.0
    %1584 = vmatpush1.msra.mxu0 0.0
    %1585 = vmatprep.subr.mxu0 0.0
    %1586 = vmatpush1.msra.mxu0 0.0
    %1587 = vmatprep.subr.mxu0 0.0
    %1588 = vmatpush1.msra.mxu0 0.0
    %1589 = vmatprep.subr.mxu0 0.0
    %1590 = vmatpush1.msra.mxu0 0.0
    %1591 = vmatprep.subr.mxu0 0.0
    %1592 = vmatpush1.msra.mxu0 0.0
    %1593 = vmatprep.subr.mxu0 0.0
    %1594 = vmatpush1.msra.mxu0 0.0
    %1595 = vmatprep.subr.mxu0 0.0
    %1596 = vmatpush1.msra.mxu0 0.0
    %1597 = vmatprep.mubr.f32.mxu0 0.0
    %1598 = vmatmul.mubr.f32.gmra.mrb[0].mxu0 %v1528
    %v1599 = vpop.f32.mrb[0].mxu0
    %v1600 = vadd.f32 0.0, %v1599
    %v1601 = vpop.f32.mrb[0].mxu0
    %1602 = vmatprep.mubr.f32.mxu0 0.0
    %1603 = vmatmul.mubr.f32.gmra.mrb[0].mxu0 %v1531
    %v1604 = vpop.f32.mrb[0].mxu0
    %v1605 = vadd.f32 0.0, %v1604
    %v1606 = vpop.f32.mrb[0].mxu0
    %1607 = vdwg.mxu0
    %v1608 = vmul.f32 %v1600, %v1525
    %v1609 = vmul.f32 %v1605, %v1526
    %s1610 = scalar_lea.vmem %s5, 16
    %v1611 = vld [vmem:[%s1610] sm:$0xff]
    %v1613 = vsel %vm320, %v1608, 0
    %v1616 = vsel %vm320, %v1609, 0
    %1618 = vmatprep.subr.mxu0 0.0
    %1619 = vmatpush1.msra.mxu0 %v1611
    %1620 = vmatprep.subr.mxu0 0.0
    %1621 = vmatpush1.msra.mxu0 0.0
    %1622 = vmatprep.subr.mxu0 0.0
    %1623 = vmatpush1.msra.mxu0 0.0
    %1624 = vmatprep.subr.mxu0 0.0
    %1625 = vmatpush1.msra.mxu0 0.0
    %1626 = vmatprep.subr.mxu0 0.0
    %1627 = vmatpush1.msra.mxu0 0.0
    %1628 = vmatprep.subr.mxu0 0.0
    %1629 = vmatpush1.msra.mxu0 0.0
    %1630 = vmatprep.subr.mxu0 0.0
    %1631 = vmatpush1.msra.mxu0 0.0
    %1632 = vmatprep.subr.mxu0 0.0
    %1633 = vmatpush1.msra.mxu0 0.0
    %1634 = vmatprep.subr.mxu0 0.0
    %1635 = vmatpush1.msra.mxu0 0.0
    %1636 = vmatprep.subr.mxu0 0.0
    %1637 = vmatpush1.msra.mxu0 0.0
    %1638 = vmatprep.subr.mxu0 0.0
    %1639 = vmatpush1.msra.mxu0 0.0
    %1640 = vmatprep.subr.mxu0 0.0
    %1641 = vmatpush1.msra.mxu0 0.0
    %1642 = vmatprep.subr.mxu0 0.0
    %1643 = vmatpush1.msra.mxu0 0.0
    %1644 = vmatprep.subr.mxu0 0.0
    %1645 = vmatpush1.msra.mxu0 0.0
    %1646 = vmatprep.subr.mxu0 0.0
    %1647 = vmatpush1.msra.mxu0 0.0
    %1648 = vmatprep.subr.mxu0 0.0
    %1649 = vmatpush1.msra.mxu0 0.0
    %1650 = vmatprep.subr.mxu0 0.0
    %1651 = vmatpush1.msra.mxu0 0.0
    %1652 = vmatprep.subr.mxu0 0.0
    %1653 = vmatpush1.msra.mxu0 0.0
    %1654 = vmatprep.subr.mxu0 0.0
    %1655 = vmatpush1.msra.mxu0 0.0
    %1656 = vmatprep.subr.mxu0 0.0
    %1657 = vmatpush1.msra.mxu0 0.0
    %1658 = vmatprep.subr.mxu0 0.0
    %1659 = vmatpush1.msra.mxu0 0.0
    %1660 = vmatprep.subr.mxu0 0.0
    %1661 = vmatpush1.msra.mxu0 0.0
    %1662 = vmatprep.subr.mxu0 0.0
    %1663 = vmatpush1.msra.mxu0 0.0
    %1664 = vmatprep.subr.mxu0 0.0
    %1665 = vmatpush1.msra.mxu0 0.0
    %1666 = vmatprep.subr.mxu0 0.0
    %1667 = vmatpush1.msra.mxu0 0.0
    %1668 = vmatprep.subr.mxu0 0.0
    %1669 = vmatpush1.msra.mxu0 0.0
    %1670 = vmatprep.subr.mxu0 0.0
    %1671 = vmatpush1.msra.mxu0 0.0
    %1672 = vmatprep.subr.mxu0 0.0
    %1673 = vmatpush1.msra.mxu0 0.0
    %1674 = vmatprep.subr.mxu0 0.0
    %1675 = vmatpush1.msra.mxu0 0.0
    %1676 = vmatprep.subr.mxu0 0.0
    %1677 = vmatpush1.msra.mxu0 0.0
    %1678 = vmatprep.subr.mxu0 0.0
    %1679 = vmatpush1.msra.mxu0 0.0
    %1680 = vmatprep.subr.mxu0 0.0
    %1681 = vmatpush1.msra.mxu0 0.0
    %1682 = vmatprep.mubr.f32.mxu0 0.0
    %1683 = vmatmul.mubr.f32.gmra.mrb[0].mxu0 %v1613
    %v1684 = vpop.f32.mrb[0].mxu0
    %v1685 = vadd.f32 0.0, %v1684
    %v1686 = vpop.f32.mrb[0].mxu0
    %1687 = vmatprep.mubr.f32.mxu0 0.0
    %1688 = vmatmul.mubr.f32.gmra.mrb[0].mxu0 %v1616
    %v1689 = vpop.f32.mrb[0].mxu0
    %v1690 = vadd.f32 0.0, %v1689
    %v1691 = vpop.f32.mrb[0].mxu0
    %1692 = vdwg.mxu0
    %v1693 = vadd.f32 %v1138, %v1685
    %v1694 = vadd.f32 %v1143, %v1690
    %s1695 = scalar_lea.vmem %s3, 96
    %v1696 = vld [vmem:[%s1695] sm:$0xff]
    %v1697 = vld [vmem:[%s1695 + $0x8] sm:$0xff]
    %v1698 = vld [vmem:[%s1695 + $0x10] sm:$0xff]
    %v1699 = vld [vmem:[%s1695 + $0x18] sm:$0xff]
    %s1700 = scalar_lea.vmem %s4, 3
    %v1701 = vld [vmem:[%s1700] sm:$0x1]
    %v1703 = vlaneseq
    %v1704 = vshrl.u32 %v1703, 7
    %v1705 = vsub.s32 0, %v1704
    %v1706 = vrot.slane %v1701, %v1705
    %1708 = vmatprep.subr.mxu0 0.0
    %1709 = vmatpush1.msra.mxu0 %v1696
    %1710 = vmatprep.subr.mxu0 0.0
    %1711 = vmatpush1.msra.mxu0 %v1697
    %1712 = vmatprep.subr.mxu0 0.0
    %1713 = vmatpush1.msra.mxu0 %v1698
    %1714 = vmatprep.subr.mxu0 0.0
    %1715 = vmatpush1.msra.mxu0 %v1699
    %1716 = vmatprep.subr.mxu0 0.0
    %1717 = vmatpush1.msra.mxu0 0.0
    %1718 = vmatprep.subr.mxu0 0.0
    %1719 = vmatpush1.msra.mxu0 0.0
    %1720 = vmatprep.subr.mxu0 0.0
    %1721 = vmatpush1.msra.mxu0 0.0
    %1722 = vmatprep.subr.mxu0 0.0
    %1723 = vmatpush1.msra.mxu0 0.0
    %1724 = vmatprep.subr.mxu0 0.0
    %1725 = vmatpush1.msra.mxu0 0.0
    %1726 = vmatprep.subr.mxu0 0.0
    %1727 = vmatpush1.msra.mxu0 0.0
    %1728 = vmatprep.subr.mxu0 0.0
    %1729 = vmatpush1.msra.mxu0 0.0
    %1730 = vmatprep.subr.mxu0 0.0
    %1731 = vmatpush1.msra.mxu0 0.0
    %1732 = vmatprep.subr.mxu0 0.0
    %1733 = vmatpush1.msra.mxu0 0.0
    %1734 = vmatprep.subr.mxu0 0.0
    %1735 = vmatpush1.msra.mxu0 0.0
    %1736 = vmatprep.subr.mxu0 0.0
    %1737 = vmatpush1.msra.mxu0 0.0
    %1738 = vmatprep.subr.mxu0 0.0
    %1739 = vmatpush1.msra.mxu0 0.0
    %1740 = vmatprep.subr.mxu0 0.0
    %1741 = vmatpush1.msra.mxu0 0.0
    %1742 = vmatprep.subr.mxu0 0.0
    %1743 = vmatpush1.msra.mxu0 0.0
    %1744 = vmatprep.subr.mxu0 0.0
    %1745 = vmatpush1.msra.mxu0 0.0
    %1746 = vmatprep.subr.mxu0 0.0
    %1747 = vmatpush1.msra.mxu0 0.0
    %1748 = vmatprep.subr.mxu0 0.0
    %1749 = vmatpush1.msra.mxu0 0.0
    %1750 = vmatprep.subr.mxu0 0.0
    %1751 = vmatpush1.msra.mxu0 0.0
    %1752 = vmatprep.subr.mxu0 0.0
    %1753 = vmatpush1.msra.mxu0 0.0
    %1754 = vmatprep.subr.mxu0 0.0
    %1755 = vmatpush1.msra.mxu0 0.0
    %1756 = vmatprep.subr.mxu0 0.0
    %1757 = vmatpush1.msra.mxu0 0.0
    %1758 = vmatprep.subr.mxu0 0.0
    %1759 = vmatpush1.msra.mxu0 0.0
    %1760 = vmatprep.subr.mxu0 0.0
    %1761 = vmatpush1.msra.mxu0 0.0
    %1762 = vmatprep.subr.mxu0 0.0
    %1763 = vmatpush1.msra.mxu0 0.0
    %1764 = vmatprep.subr.mxu0 0.0
    %1765 = vmatpush1.msra.mxu0 0.0
    %1766 = vmatprep.subr.mxu0 0.0
    %1767 = vmatpush1.msra.mxu0 0.0
    %1768 = vmatprep.subr.mxu0 0.0
    %1769 = vmatpush1.msra.mxu0 0.0
    %1770 = vmatprep.subr.mxu0 0.0
    %1771 = vmatpush1.msra.mxu0 0.0
    %1772 = vmatprep.mubr.f32.mxu0 0.0
    %1773 = vmatmul.mubr.f32.gmra.mrb[0].mxu0 %v48
    %v1774 = vpop.f32.mrb[0].mxu0
    %v1775 = vadd.f32 %v1706, %v1774
    %v1776 = vpop.f32.mrb[0].mxu0
    %1777 = vmatprep.mubr.f32.mxu0 0.0
    %1778 = vmatmul.mubr.f32.gmra.mrb[0].mxu0 %v51
    %v1779 = vpop.f32.mrb[0].mxu0
    %v1780 = vadd.f32 %v1706, %v1779
    %v1781 = vpop.f32.mrb[0].mxu0
    %1782 = vdwg.mxu0
    %s1783 = scalar_lea.vmem %s3, 224
    %v1784 = vld [vmem:[%s1783] sm:$0xff]
    %v1785 = vld [vmem:[%s1783 + $0x8] sm:$0xff]
    %v1786 = vld [vmem:[%s1783 + $0x10] sm:$0xff]
    %v1787 = vld [vmem:[%s1783 + $0x18] sm:$0xff]
    %1788 = vmatprep.subr.mxu0 0.0
    %1789 = vmatpush1.msra.mxu0 %v1784
    %1790 = vmatprep.subr.mxu0 0.0
    %1791 = vmatpush1.msra.mxu0 %v1785
    %1792 = vmatprep.subr.mxu0 0.0
    %1793 = vmatpush1.msra.mxu0 %v1786
    %1794 = vmatprep.subr.mxu0 0.0
    %1795 = vmatpush1.msra.mxu0 %v1787
    %1796 = vmatprep.subr.mxu0 0.0
    %1797 = vmatpush1.msra.mxu0 0.0
    %1798 = vmatprep.subr.mxu0 0.0
    %1799 = vmatpush1.msra.mxu0 0.0
    %1800 = vmatprep.subr.mxu0 0.0
    %1801 = vmatpush1.msra.mxu0 0.0
    %1802 = vmatprep.subr.mxu0 0.0
    %1803 = vmatpush1.msra.mxu0 0.0
    %1804 = vmatprep.subr.mxu0 0.0
    %1805 = vmatpush1.msra.mxu0 0.0
    %1806 = vmatprep.subr.mxu0 0.0
    %1807 = vmatpush1.msra.mxu0 0.0
    %1808 = vmatprep.subr.mxu0 0.0
    %1809 = vmatpush1.msra.mxu0 0.0
    %1810 = vmatprep.subr.mxu0 0.0
    %1811 = vmatpush1.msra.mxu0 0.0
    %1812 = vmatprep.subr.mxu0 0.0
    %1813 = vmatpush1.msra.mxu0 0.0
    %1814 = vmatprep.subr.mxu0 0.0
    %1815 = vmatpush1.msra.mxu0 0.0
    %1816 = vmatprep.subr.mxu0 0.0
    %1817 = vmatpush1.msra.mxu0 0.0
    %1818 = vmatprep.subr.mxu0 0.0
    %1819 = vmatpush1.msra.mxu0 0.0
    %1820 = vmatprep.subr.mxu0 0.0
    %1821 = vmatpush1.msra.mxu0 0.0
    %1822 = vmatprep.subr.mxu0 0.0
    %1823 = vmatpush1.msra.mxu0 0.0
    %1824 = vmatprep.subr.mxu0 0.0
    %1825 = vmatpush1.msra.mxu0 0.0
    %1826 = vmatprep.subr.mxu0 0.0
    %1827 = vmatpush1.msra.mxu0 0.0
    %1828 = vmatprep.subr.mxu0 0.0
    %1829 = vmatpush1.msra.mxu0 0.0
    %1830 = vmatprep.subr.mxu0 0.0
    %1831 = vmatpush1.msra.mxu0 0.0
    %1832 = vmatprep.subr.mxu0 0.0
    %1833 = vmatpush1.msra.mxu0 0.0
    %1834 = vmatprep.subr.mxu0 0.0
    %1835 = vmatpush1.msra.mxu0 0.0
    %1836 = vmatprep.subr.mxu0 0.0
    %1837 = vmatpush1.msra.mxu0 0.0
    %1838 = vmatprep.subr.mxu0 0.0
    %1839 = vmatpush1.msra.mxu0 0.0
    %1840 = vmatprep.subr.mxu0 0.0
    %1841 = vmatpush1.msra.mxu0 0.0
    %1842 = vmatprep.subr.mxu0 0.0
    %1843 = vmatpush1.msra.mxu0 0.0
    %1844 = vmatprep.subr.mxu0 0.0
    %1845 = vmatpush1.msra.mxu0 0.0
    %1846 = vmatprep.subr.mxu0 0.0
    %1847 = vmatpush1.msra.mxu0 0.0
    %1848 = vmatprep.subr.mxu0 0.0
    %1849 = vmatpush1.msra.mxu0 0.0
    %1850 = vmatprep.subr.mxu0 0.0
    %1851 = vmatpush1.msra.mxu0 0.0
    %1852 = vmatprep.mubr.f32.mxu0 0.0
    %1853 = vmatmul.mubr.f32.gmra.mrb[0].mxu0 %v134
    %v1854 = vpop.f32.mrb[0].mxu0
    %v1855 = vadd.f32 0.0, %v1854
    %v1856 = vpop.f32.mrb[0].mxu0
    %1857 = vmatprep.mubr.f32.mxu0 0.0
    %1858 = vmatmul.mubr.f32.gmra.mrb[0].mxu0 %v137
    %v1859 = vpop.f32.mrb[0].mxu0
    %v1860 = vadd.f32 0.0, %v1859
    %v1861 = vpop.f32.mrb[0].mxu0
    %1862 = vmatprep.mubr.f32.mxu0 0.0
    %1863 = vmatmul.mubr.f32.gmra.mrb[0].mxu0 %v140
    %v1864 = vpop.f32.mrb[0].mxu0
    %v1865 = vadd.f32 0.0, %v1864
    %v1866 = vpop.f32.mrb[0].mxu0
    %1867 = vmatprep.mubr.f32.mxu0 0.0
    %1868 = vmatmul.mubr.f32.gmra.mrb[0].mxu0 %v143
    %v1869 = vpop.f32.mrb[0].mxu0
    %v1870 = vadd.f32 0.0, %v1869
    %v1871 = vpop.f32.mrb[0].mxu0
    %1872 = vdwg.mxu0
    %s1873 = scalar_lea.vmem %s3, 352
    %v1874 = vld [vmem:[%s1873] sm:$0xff]
    %v1875 = vld [vmem:[%s1873 + $0x8] sm:$0xff]
    %v1876 = vld [vmem:[%s1873 + $0x10] sm:$0xff]
    %v1877 = vld [vmem:[%s1873 + $0x18] sm:$0xff]
    %1878 = vmatprep.subr.mxu0 0.0
    %1879 = vmatpush1.msra.mxu0 %v1874
    %1880 = vmatprep.subr.mxu0 0.0
    %1881 = vmatpush1.msra.mxu0 %v1875
    %1882 = vmatprep.subr.mxu0 0.0
    %1883 = vmatpush1.msra.mxu0 %v1876
    %1884 = vmatprep.subr.mxu0 0.0
    %1885 = vmatpush1.msra.mxu0 %v1877
    %1886 = vmatprep.subr.mxu0 0.0
    %1887 = vmatpush1.msra.mxu0 0.0
    %1888 = vmatprep.subr.mxu0 0.0
    %1889 = vmatpush1.msra.mxu0 0.0
    %1890 = vmatprep.subr.mxu0 0.0
    %1891 = vmatpush1.msra.mxu0 0.0
    %1892 = vmatprep.subr.mxu0 0.0
    %1893 = vmatpush1.msra.mxu0 0.0
    %1894 = vmatprep.subr.mxu0 0.0
    %1895 = vmatpush1.msra.mxu0 0.0
    %1896 = vmatprep.subr.mxu0 0.0
    %1897 = vmatpush1.msra.mxu0 0.0
    %1898 = vmatprep.subr.mxu0 0.0
    %1899 = vmatpush1.msra.mxu0 0.0
    %1900 = vmatprep.subr.mxu0 0.0
    %1901 = vmatpush1.msra.mxu0 0.0
    %1902 = vmatprep.subr.mxu0 0.0
    %1903 = vmatpush1.msra.mxu0 0.0
    %1904 = vmatprep.subr.mxu0 0.0
    %1905 = vmatpush1.msra.mxu0 0.0
    %1906 = vmatprep.subr.mxu0 0.0
    %1907 = vmatpush1.msra.mxu0 0.0
    %1908 = vmatprep.subr.mxu0 0.0
    %1909 = vmatpush1.msra.mxu0 0.0
    %1910 = vmatprep.subr.mxu0 0.0
    %1911 = vmatpush1.msra.mxu0 0.0
    %1912 = vmatprep.subr.mxu0 0.0
    %1913 = vmatpush1.msra.mxu0 0.0
    %1914 = vmatprep.subr.mxu0 0.0
    %1915 = vmatpush1.msra.mxu0 0.0
    %1916 = vmatprep.subr.mxu0 0.0
    %1917 = vmatpush1.msra.mxu0 0.0
    %1918 = vmatprep.subr.mxu0 0.0
    %1919 = vmatpush1.msra.mxu0 0.0
    %1920 = vmatprep.subr.mxu0 0.0
    %1921 = vmatpush1.msra.mxu0 0.0
    %1922 = vmatprep.subr.mxu0 0.0
    %1923 = vmatpush1.msra.mxu0 0.0
    %1924 = vmatprep.subr.mxu0 0.0
    %1925 = vmatpush1.msra.mxu0 0.0
    %1926 = vmatprep.subr.mxu0 0.0
    %1927 = vmatpush1.msra.mxu0 0.0
    %1928 = vmatprep.subr.mxu0 0.0
    %1929 = vmatpush1.msra.mxu0 0.0
    %1930 = vmatprep.subr.mxu0 0.0
    %1931 = vmatpush1.msra.mxu0 0.0
    %1932 = vmatprep.subr.mxu0 0.0
    %1933 = vmatpush1.msra.mxu0 0.0
    %1934 = vmatprep.subr.mxu0 0.0
    %1935 = vmatpush1.msra.mxu0 0.0
    %1936 = vmatprep.subr.mxu0 0.0
    %1937 = vmatpush1.msra.mxu0 0.0
    %1938 = vmatprep.subr.mxu0 0.0
    %1939 = vmatpush1.msra.mxu0 0.0
    %1940 = vmatprep.subr.mxu0 0.0
    %1941 = vmatpush1.msra.mxu0 0.0
    %1942 = vmatprep.mubr.f32.mxu0 0.0
    %1943 = vmatmul.mubr.f32.gmra.mrb[0].mxu0 %v134
    %v1944 = vpop.f32.mrb[0].mxu0
    %v1945 = vadd.f32 0.0, %v1944
    %v1946 = vpop.f32.mrb[0].mxu0
    %1947 = vmatprep.mubr.f32.mxu0 0.0
    %1948 = vmatmul.mubr.f32.gmra.mrb[0].mxu0 %v137
    %v1949 = vpop.f32.mrb[0].mxu0
    %v1950 = vadd.f32 0.0, %v1949
    %v1951 = vpop.f32.mrb[0].mxu0
    %1952 = vmatprep.mubr.f32.mxu0 0.0
    %1953 = vmatmul.mubr.f32.gmra.mrb[0].mxu0 %v140
    %v1954 = vpop.f32.mrb[0].mxu0
    %v1955 = vadd.f32 0.0, %v1954
    %v1956 = vpop.f32.mrb[0].mxu0
    %1957 = vmatprep.mubr.f32.mxu0 0.0
    %1958 = vmatmul.mubr.f32.gmra.mrb[0].mxu0 %v143
    %v1959 = vpop.f32.mrb[0].mxu0
    %v1960 = vadd.f32 0.0, %v1959
    %v1961 = vpop.f32.mrb[0].mxu0
    %1962 = vdwg.mxu0
    %v1964 = vsel %vm320, %v1775, 0
    %v1967 = vsel %vm320, %v1780, 0
    %v1970 = vsel %vm320, %v1855, 0
    %v1973 = vsel %vm320, %v1860, 0
    %v1976 = vsel %vm320, %v1865, 0
    %v1979 = vsel %vm320, %v1870, 0
    %1981 = vmatprep.subr.mxu0 0.0
    %1982 = vmatpush1.xpose.msra.mxu0 %v1970
    %1983 = vmatprep.subr.mxu0 0.0
    %1984 = vmatpush1.xpose.msra.mxu0 %v1973
    %1985 = vmatprep.subr.mxu0 0.0
    %1986 = vmatpush1.xpose.msra.mxu0 %v1976
    %1987 = vmatprep.subr.mxu0 0.0
    %1988 = vmatpush1.xpose.msra.mxu0 %v1979
    %1989 = vmatprep.subr.mxu0 0.0
    %1990 = vmatpush1.xpose.msra.mxu0 0.0
    %1991 = vmatprep.subr.mxu0 0.0
    %1992 = vmatpush1.xpose.msra.mxu0 0.0
    %1993 = vmatprep.subr.mxu0 0.0
    %1994 = vmatpush1.xpose.msra.mxu0 0.0
    %1995 = vmatprep.subr.mxu0 0.0
    %1996 = vmatpush1.xpose.msra.mxu0 0.0
    %1997 = vmatprep.subr.mxu0 0.0
    %1998 = vmatpush1.xpose.msra.mxu0 0.0
    %1999 = vmatprep.subr.mxu0 0.0
    %2000 = vmatpush1.xpose.msra.mxu0 0.0
    %2001 = vmatprep.subr.mxu0 0.0
    %2002 = vmatpush1.xpose.msra.mxu0 0.0
    %2003 = vmatprep.subr.mxu0 0.0
    %2004 = vmatpush1.xpose.msra.mxu0 0.0
    %2005 = vmatprep.subr.mxu0 0.0
    %2006 = vmatpush1.xpose.msra.mxu0 0.0
    %2007 = vmatprep.subr.mxu0 0.0
    %2008 = vmatpush1.xpose.msra.mxu0 0.0
    %2009 = vmatprep.subr.mxu0 0.0
    %2010 = vmatpush1.xpose.msra.mxu0 0.0
    %2011 = vmatprep.subr.mxu0 0.0
    %2012 = vmatpush1.xpose.msra.mxu0 0.0
    %2013 = vmatprep.subr.mxu0 0.0
    %2014 = vmatpush1.xpose.msra.mxu0 0.0
    %2015 = vmatprep.subr.mxu0 0.0
    %2016 = vmatpush1.xpose.msra.mxu0 0.0
    %2017 = vmatprep.subr.mxu0 0.0
    %2018 = vmatpush1.xpose.msra.mxu0 0.0
    %2019 = vmatprep.subr.mxu0 0.0
    %2020 = vmatpush1.xpose.msra.mxu0 0.0
    %2021 = vmatprep.subr.mxu0 0.0
    %2022 = vmatpush1.xpose.msra.mxu0 0.0
    %2023 = vmatprep.subr.mxu0 0.0
    %2024 = vmatpush1.xpose.msra.mxu0 0.0
    %2025 = vmatprep.subr.mxu0 0.0
    %2026 = vmatpush1.xpose.msra.mxu0 0.0
    %2027 = vmatprep.subr.mxu0 0.0
    %2028 = vmatpush1.xpose.msra.mxu0 0.0
    %2029 = vmatprep.subr.mxu0 0.0
    %2030 = vmatpush1.xpose.msra.mxu0 0.0
    %2031 = vmatprep.subr.mxu0 0.0
    %2032 = vmatpush1.xpose.msra.mxu0 0.0
    %2033 = vmatprep.subr.mxu0 0.0
    %2034 = vmatpush1.xpose.msra.mxu0 0.0
    %2035 = vmatprep.subr.mxu0 0.0
    %2036 = vmatpush1.xpose.msra.mxu0 0.0
    %2037 = vmatprep.subr.mxu0 0.0
    %2038 = vmatpush1.xpose.msra.mxu0 0.0
    %2039 = vmatprep.subr.mxu0 0.0
    %2040 = vmatpush1.xpose.msra.mxu0 0.0
    %2041 = vmatprep.subr.mxu0 0.0
    %2042 = vmatpush1.xpose.msra.mxu0 0.0
    %2043 = vmatprep.subr.mxu0 0.0
    %2044 = vmatpush1.xpose.msra.mxu0 0.0
    %2045 = vmatprep.mubr.f32.mxu0 0.0
    %2046 = vmatmul.mubr.f32.gmra.mrb[0].mxu0 %v1964
    %v2047 = vpop.f32.mrb[0].mxu0
    %v2048 = vadd.f32 %v33, %v2047
    %v2049 = vpop.f32.mrb[0].mxu0
    %2050 = vmatprep.mubr.f32.mxu0 0.0
    %2051 = vmatmul.mubr.f32.gmra.mrb[0].mxu0 %v1967
    %v2052 = vpop.f32.mrb[0].mxu0
    %v2053 = vadd.f32 %v34, %v2052
    %v2054 = vpop.f32.mrb[0].mxu0
    %2055 = vdwg.mxu0
    %v2056 = vsel %vm46, %v2048, -inf
    %2057 = vmax.xlane.f32.xlu0 %v2056
    %v2058 = vpop.xlane.xlu0 %2057
    %v2059 = vsel %vm46, %v2053, -inf
    %2060 = vmax.xlane.f32.xlu0 %v2059
    %v2061 = vpop.xlane.xlu0 %2060
    %v2062 = vsub.f32 %v2048, %v2058
    %v2063 = vsub.f32 %v2053, %v2061
    %v2064 = vmul.f32 %v2062, 1.442695
    %v2065 = vpow.pop %v2064
    %v2066 = vmul.f32 %v2063, 1.442695
    %v2067 = vpow.pop %v2066
    %v2068 = vsel %vm46, %v2065, 0.0
    %2069 = vadd.xlane.f32.xlu0 %v2068
    %v2070 = vpop.xlane.xlu0 %2069
    %v2071 = vsel %vm46, %v2067, 0.0
    %2072 = vadd.xlane.f32.xlu0 %v2071
    %v2073 = vpop.xlane.xlu0 %2072
    %v2074 = vrcp.pop %v2070
    %v2075 = vrcp.pop %v2073
    %v2077 = vsel %vm46, %v2065, 0
    %v2080 = vsel %vm46, %v2067, 0
    %2082 = vmatprep.subr.mxu0 0.0
    %2083 = vmatpush1.msra.mxu0 %v1945
    %2084 = vmatprep.subr.mxu0 0.0
    %2085 = vmatpush1.msra.mxu0 %v1950
    %2086 = vmatprep.subr.mxu0 0.0
    %2087 = vmatpush1.msra.mxu0 %v1955
    %2088 = vmatprep.subr.mxu0 0.0
    %2089 = vmatpush1.msra.mxu0 %v1960
    %2090 = vmatprep.subr.mxu0 0.0
    %2091 = vmatpush1.msra.mxu0 0.0
    %2092 = vmatprep.subr.mxu0 0.0
    %2093 = vmatpush1.msra.mxu0 0.0
    %2094 = vmatprep.subr.mxu0 0.0
    %2095 = vmatpush1.msra.mxu0 0.0
    %2096 = vmatprep.subr.mxu0 0.0
    %2097 = vmatpush1.msra.mxu0 0.0
    %2098 = vmatprep.subr.mxu0 0.0
    %2099 = vmatpush1.msra.mxu0 0.0
    %2100 = vmatprep.subr.mxu0 0.0
    %2101 = vmatpush1.msra.mxu0 0.0
    %2102 = vmatprep.subr.mxu0 0.0
    %2103 = vmatpush1.msra.mxu0 0.0
    %2104 = vmatprep.subr.mxu0 0.0
    %2105 = vmatpush1.msra.mxu0 0.0
    %2106 = vmatprep.subr.mxu0 0.0
    %2107 = vmatpush1.msra.mxu0 0.0
    %2108 = vmatprep.subr.mxu0 0.0
    %2109 = vmatpush1.msra.mxu0 0.0
    %2110 = vmatprep.subr.mxu0 0.0
    %2111 = vmatpush1.msra.mxu0 0.0
    %2112 = vmatprep.subr.mxu0 0.0
    %2113 = vmatpush1.msra.mxu0 0.0
    %2114 = vmatprep.subr.mxu0 0.0
    %2115 = vmatpush1.msra.mxu0 0.0
    %2116 = vmatprep.subr.mxu0 0.0
    %2117 = vmatpush1.msra.mxu0 0.0
    %2118 = vmatprep.subr.mxu0 0.0
    %2119 = vmatpush1.msra.mxu0 0.0
    %2120 = vmatprep.subr.mxu0 0.0
    %2121 = vmatpush1.msra.mxu0 0.0
    %2122 = vmatprep.subr.mxu0 0.0
    %2123 = vmatpush1.msra.mxu0 0.0
    %2124 = vmatprep.subr.mxu0 0.0
    %2125 = vmatpush1.msra.mxu0 0.0
    %2126 = vmatprep.subr.mxu0 0.0
    %2127 = vmatpush1.msra.mxu0 0.0
    %2128 = vmatprep.subr.mxu0 0.0
    %2129 = vmatpush1.msra.mxu0 0.0
    %2130 = vmatprep.subr.mxu0 0.0
    %2131 = vmatpush1.msra.mxu0 0.0
    %2132 = vmatprep.subr.mxu0 0.0
    %2133 = vmatpush1.msra.mxu0 0.0
    %2134 = vmatprep.subr.mxu0 0.0
    %2135 = vmatpush1.msra.mxu0 0.0
    %2136 = vmatprep.subr.mxu0 0.0
    %2137 = vmatpush1.msra.mxu0 0.0
    %2138 = vmatprep.subr.mxu0 0.0
    %2139 = vmatpush1.msra.mxu0 0.0
    %2140 = vmatprep.subr.mxu0 0.0
    %2141 = vmatpush1.msra.mxu0 0.0
    %2142 = vmatprep.subr.mxu0 0.0
    %2143 = vmatpush1.msra.mxu0 0.0
    %2144 = vmatprep.subr.mxu0 0.0
    %2145 = vmatpush1.msra.mxu0 0.0
    %2146 = vmatprep.mubr.f32.mxu0 0.0
    %2147 = vmatmul.mubr.f32.gmra.mrb[0].mxu0 %v2077
    %v2148 = vpop.f32.mrb[0].mxu0
    %v2149 = vadd.f32 0.0, %v2148
    %v2150 = vpop.f32.mrb[0].mxu0
    %2151 = vmatprep.mubr.f32.mxu0 0.0
    %2152 = vmatmul.mubr.f32.gmra.mrb[0].mxu0 %v2080
    %v2153 = vpop.f32.mrb[0].mxu0
    %v2154 = vadd.f32 0.0, %v2153
    %v2155 = vpop.f32.mrb[0].mxu0
    %2156 = vdwg.mxu0
    %v2157 = vmul.f32 %v2149, %v2074
    %v2158 = vmul.f32 %v2154, %v2075
    %s2159 = scalar_lea.vmem %s5, 24
    %v2160 = vld [vmem:[%s2159] sm:$0xff]
    %v2162 = vsel %vm320, %v2157, 0
    %v2165 = vsel %vm320, %v2158, 0
    %2167 = vmatprep.subr.mxu0 0.0
    %2168 = vmatpush1.msra.mxu0 %v2160
    %2169 = vmatprep.subr.mxu0 0.0
    %2170 = vmatpush1.msra.mxu0 0.0
    %2171 = vmatprep.subr.mxu0 0.0
    %2172 = vmatpush1.msra.mxu0 0.0
    %2173 = vmatprep.subr.mxu0 0.0
    %2174 = vmatpush1.msra.mxu0 0.0
    %2175 = vmatprep.subr.mxu0 0.0
    %2176 = vmatpush1.msra.mxu0 0.0
    %2177 = vmatprep.subr.mxu0 0.0
    %2178 = vmatpush1.msra.mxu0 0.0
    %2179 = vmatprep.subr.mxu0 0.0
    %2180 = vmatpush1.msra.mxu0 0.0
    %2181 = vmatprep.subr.mxu0 0.0
    %2182 = vmatpush1.msra.mxu0 0.0
    %2183 = vmatprep.subr.mxu0 0.0
    %2184 = vmatpush1.msra.mxu0 0.0
    %2185 = vmatprep.subr.mxu0 0.0
    %2186 = vmatpush1.msra.mxu0 0.0
    %2187 = vmatprep.subr.mxu0 0.0
    %2188 = vmatpush1.msra.mxu0 0.0
    %2189 = vmatprep.subr.mxu0 0.0
    %2190 = vmatpush1.msra.mxu0 0.0
    %2191 = vmatprep.subr.mxu0 0.0
    %2192 = vmatpush1.msra.mxu0 0.0
    %2193 = vmatprep.subr.mxu0 0.0
    %2194 = vmatpush1.msra.mxu0 0.0
    %2195 = vmatprep.subr.mxu0 0.0
    %2196 = vmatpush1.msra.mxu0 0.0
    %2197 = vmatprep.subr.mxu0 0.0
    %2198 = vmatpush1.msra.mxu0 0.0
    %2199 = vmatprep.subr.mxu0 0.0
    %2200 = vmatpush1.msra.mxu0 0.0
    %2201 = vmatprep.subr.mxu0 0.0
    %2202 = vmatpush1.msra.mxu0 0.0
    %2203 = vmatprep.subr.mxu0 0.0
    %2204 = vmatpush1.msra.mxu0 0.0
    %2205 = vmatprep.subr.mxu0 0.0
    %2206 = vmatpush1.msra.mxu0 0.0
    %2207 = vmatprep.subr.mxu0 0.0
    %2208 = vmatpush1.msra.mxu0 0.0
    %2209 = vmatprep.subr.mxu0 0.0
    %2210 = vmatpush1.msra.mxu0 0.0
    %2211 = vmatprep.subr.mxu0 0.0
    %2212 = vmatpush1.msra.mxu0 0.0
    %2213 = vmatprep.subr.mxu0 0.0
    %2214 = vmatpush1.msra.mxu0 0.0
    %2215 = vmatprep.subr.mxu0 0.0
    %2216 = vmatpush1.msra.mxu0 0.0
    %2217 = vmatprep.subr.mxu0 0.0
    %2218 = vmatpush1.msra.mxu0 0.0
    %2219 = vmatprep.subr.mxu0 0.0
    %2220 = vmatpush1.msra.mxu0 0.0
    %2221 = vmatprep.subr.mxu0 0.0
    %2222 = vmatpush1.msra.mxu0 0.0
    %2223 = vmatprep.subr.mxu0 0.0
    %2224 = vmatpush1.msra.mxu0 0.0
    %2225 = vmatprep.subr.mxu0 0.0
    %2226 = vmatpush1.msra.mxu0 0.0
    %2227 = vmatprep.subr.mxu0 0.0
    %2228 = vmatpush1.msra.mxu0 0.0
    %2229 = vmatprep.subr.mxu0 0.0
    %2230 = vmatpush1.msra.mxu0 0.0
    %2231 = vmatprep.mubr.f32.mxu0 0.0
    %2232 = vmatmul.mubr.f32.gmra.mrb[0].mxu0 %v2162
    %v2233 = vpop.f32.mrb[0].mxu0
    %v2234 = vadd.f32 0.0, %v2233
    %v2235 = vpop.f32.mrb[0].mxu0
    %2236 = vmatprep.mubr.f32.mxu0 0.0
    %2237 = vmatmul.mubr.f32.gmra.mrb[0].mxu0 %v2165
    %v2238 = vpop.f32.mrb[0].mxu0
    %v2239 = vadd.f32 0.0, %v2238
    %v2240 = vpop.f32.mrb[0].mxu0
    %2241 = vdwg.mxu0
    %v2242 = vadd.f32 %v1693, %v2234
    %v2243 = vadd.f32 %v1694, %v2239
    %v2244 = vld [vmem:[%s6] sm:$0x1]
    %v2245 = vld [vmem:[%s6 + $0x1] sm:$0x1]
    %v2246 = vld [vmem:[%s6 + $0x2] sm:$0x1]
    %v2247 = vlaneseq
    %v2248 = vshrl.u32 %v2247, 7
    %v2249 = vsub.s32 0, %v2248
    %v2250 = vrot.slane %v2244, %v2249
    %v2251 = vadd.f32 %v2242, %v2250
    %v2252 = vadd.f32 %v2243, %v2250
    %v2253 = vadd.f32 %v2251, %v27
    %v2254 = vadd.f32 %v2252, %v28
    %v2255 = vsel %vm46, %v2253, 0.0
    %2256 = vadd.xlane.f32.xlu0 %v2255
    %v2257 = vpop.xlane.xlu0 %2256
    %v2258 = vsel %vm46, %v2254, 0.0
    %2259 = vadd.xlane.f32.xlu0 %v2258
    %v2260 = vpop.xlane.xlu0 %2259
    %v2261 = vrcp.pop 32.0
    %v2262 = vmul.f32 %v2257, %v2261
    %v2263 = vmul.f32 %v2260, %v2261
    %v2264 = vsub.f32 %v2253, %v2262
    %v2265 = vsub.f32 %v2254, %v2263
    %v2266 = vmul.f32 %v2264, %v2264
    %v2267 = vmul.f32 %v2265, %v2265
    %v2268 = vsel %vm46, %v2266, 0.0
    %2269 = vadd.xlane.f32.xlu0 %v2268
    %v2270 = vpop.xlane.xlu0 %2269
    %v2271 = vsel %vm46, %v2267, 0.0
    %2272 = vadd.xlane.f32.xlu0 %v2271
    %v2273 = vpop.xlane.xlu0 %2272
    %v2274 = vmul.f32 %v2270, %v2261
    %v2275 = vmul.f32 %v2273, %v2261
    %v2276 = vadd.f32 %v2274, 1e-12
    %v2277 = vadd.f32 %v2275, 1e-12
    %v2278 = vrsqrt.pop %v2276
    %v2279 = vrsqrt.pop %v2277
    %v2280 = vmul.f32 %v2264, %v2278
    %v2281 = vmul.f32 %v2265, %v2279
    %v2282 = vlaneseq
    %v2283 = vshrl.u32 %v2282, 7
    %v2284 = vsub.s32 0, %v2283
    %v2285 = vrot.slane %v2245, %v2284
    %v2286 = vmul.f32 %v2280, %v2285
    %v2287 = vmul.f32 %v2281, %v2285
    %v2288 = vlaneseq
    %v2289 = vshrl.u32 %v2288, 7
    %v2290 = vsub.s32 0, %v2289
    %v2291 = vrot.slane %v2246, %v2290
    %v2292 = vadd.f32 %v2286, %v2291
    %v2293 = vadd.f32 %v2287, %v2291
    %2294 = vst.msk [vmem:[#allocation2] sm:$0xff] %vm46, %v2292
    %2295 = vst.msk [vmem:[#allocation2 + $0x8] sm:$0xff] %vm46, %v2293
    // Predicated region
    $region30: #{tpu_custom_call.1} parent=1 // pred_check
      _
    $region31: #{tpu_custom_call.1} parent=1 // pred_check_branch
      %2297 = sbr.rel (0) target = $region33
    $region32: #{tpu_custom_call.1} parent=1 // pred_region
      %s2299 = ssub.s32 256, 256
      %2300 = vsyncadd [#allocation3], %s2299
      %s2301 = sshll.u32 [#allocation2], 4
      %s2302 = int_to_ptr.vmem [resolvable:$true] %s2301
      %2307 = dma.vmem_to_hbm [thread:$0]  %s2302, 256, %s7, [#allocation3], 128, 128, 8
    $region33: #{tpu_custom_call.1} parent=1 // pred_fallthru
      _
    // Predicated region
    $region34: #{tpu_custom_call.1} parent=1 // pred_check
      _
    $region35: #{tpu_custom_call.1} parent=1 // pred_check_branch
      %2309 = sbr.rel (0) target = $region37
    $region36: #{tpu_custom_call.1} parent=1 // pred_region
      %2310 = dma.done [#allocation3], 256
    $region37: #{tpu_custom_call.1} parent=1 // pred_fallthru
      _
    %2311 = vsyncpa [#allocation3], 1

</llo_original>
